<compile_context>
chip_gen: v7x
topology: tpu7x:2x2x1
jax: 0.10.0
libtpu: 0.0.40
codegen_flags: <defaults>
</compile_context>

<pallas_src>
import functools

import jax
import jax.numpy as jnp
from jax.experimental import pallas as pl
from jax.experimental.pallas import tpu as pltpu


def gat_layer_kernel(er_ref, res_ref, el_ref, fs_ref, adj_ref, out_ref,
                     m_sc, l_sc, acc_sc, *, num_heads, out_feats, neg_slope):
    H, D = num_heads, out_feats
    HD = H * D
    j = pl.program_id(1)

    # Online-softmax state lives in VMEM scratch; (re)initialize at the start
    # of every dst tile's src sweep (src axis is innermost, so this is safe
    # under megacore sharding of the "parallel" dst axis).
    @pl.when(j == 0)
    def _init():
        m_sc[...] = jnp.full_like(m_sc, -jnp.inf)
        l_sc[...] = jnp.zeros_like(l_sc)
        acc_sc[...] = jnp.zeros_like(acc_sc)

    mask = adj_ref[...] != 0                         # (T, S) bool, straight from int8
    er = er_ref[...]                                 # (T, H)  f32
    el = el_ref[...]                                 # (H, S)  f32, lane-dense
    fs = fs_ref[...]                                 # (S, HD) bf16
    m_prev = m_sc[...]                               # (T, H)  f32
    l_prev = l_sc[...]                               # (T, H)  f32
    neg = jnp.float32(-1e30)

    m_cols, l_cols, acc_cols = [], [], []
    for h in range(H):                               # small static head loop
        # e[v, u] = leaky_relu(el[u] + er[v]); LeakyReLU + edge-mask fused.
        e = er[:, h:h + 1] + el[h:h + 1, :]          # (T, S)
        e = jnp.where(mask, jnp.maximum(e, neg_slope * e), neg)
        m_new = jnp.maximum(m_prev[:, h:h + 1],
                            jnp.max(e, axis=-1, keepdims=True))      # (T, 1)
        alpha = jnp.exp(m_prev[:, h:h + 1] - m_new)                  # (T, 1)
        p = jnp.exp(e - m_new)                       # (T, S) f32; masked lanes -> 0
        l_cols.append(alpha * l_prev[:, h:h + 1]
                      + jnp.sum(p, axis=-1, keepdims=True))
        # Dominant MXU work: bf16 operands, f32 accumulation.
        contrib = jnp.dot(p.astype(jnp.bfloat16), fs[:, h * D:(h + 1) * D],
                          preferred_element_type=jnp.float32)        # (T, D)
        acc_cols.append(alpha * acc_sc[:, h * D:(h + 1) * D] + contrib)
        m_cols.append(m_new)

    m_sc[...] = jnp.concatenate(m_cols, axis=-1)
    l_sc[...] = jnp.concatenate(l_cols, axis=-1)
    acc_sc[...] = jnp.concatenate(acc_cols, axis=-1)

    @pl.when(j == pl.num_programs(1) - 1)
    def _finalize():
        # Normalize once after the full src sweep; reciprocal rides the EUP.
        # NOTE: a dst node with zero in-edges gets a uniform (finite) average
        # instead of the reference's 0/0 NaN (documented divergence).
        inv = pl.reciprocal(l_sc[...], approx=True)                  # (T, H)
        pieces = [acc_sc[:, h * D:(h + 1) * D] * inv[:, h:h + 1]
                  for h in range(H)]
        # Single lane-dense store of the whole dst tile (flatten(1) layout).
        out_ref[...] = jnp.concatenate(pieces, axis=-1) + res_ref[...]


def _pad_tile_bytes(rows, cols, bytes_per_el):
    r = ((max(rows, 1) + 7) // 8) * 8
    c = ((max(cols, 1) + 127) // 128) * 128
    return r * c * bytes_per_el


def gat_layer(feat, W, W_res, attn_l, attn_r, adj_in, neg_slope=0.2,
              tile_dst=256, tile_src=2048):
    """GATLayer forward (adj=None path, residual Linear, agg_mode='flatten').

    feat:   (N, F) node features (float32).
    W:      (F, H*D)  == fc.weight.T
    W_res:  (F, H*D)  == res_fc.weight.T
    attn_l, attn_r: (H, D)
    adj_in: (N_dst, N_src) 0/1 mask, adj_in[v, u] = 1 iff edge u -> v.
    """
    N, F = feat.shape
    H, D = attn_l.shape
    HD = H * D
    T = min(tile_dst, N)
    S = min(tile_src, N)
    assert N % T == 0 and N % S == 0, "pad N to a multiple of the tile sizes"
    assert S % 128 == 0 or S == N, "src tile must be lane-aligned (mult of 128)"

    # --- Grid-invariant work hoisted to XLA (computed exactly once) ---------
    fs_f32 = feat @ W                                       # (N, HD) feat_src
    fs3 = fs_f32.reshape(N, H, D)
    el_rows = jnp.einsum('nhd,hd->hn', fs3, attn_l)         # (H, N) lane-dense
    er = jnp.einsum('nhd,hd->nh', fs3, attn_r)              # (N, H)
    res = feat @ W_res                                      # (N, HD) residual
    fs_bf = fs_f32.astype(jnp.bfloat16)                     # bf16 MXU operand
    adj_i8 = adj_in.astype(jnp.int8)                        # 4x less DMA/VMEM

    # Explicit VMEM budget: double-buffered streamed tiles + scratch (+margin).
    streamed = (_pad_tile_bytes(T, S, 1)        # adj tile (int8)
                + _pad_tile_bytes(S, HD, 2)     # feat_src tile (bf16)
                + _pad_tile_bytes(H, S, 4)      # el rows tile
                + _pad_tile_bytes(T, H, 4)      # er tile
                + _pad_tile_bytes(T, HD, 4)     # res tile
                + _pad_tile_bytes(T, HD, 4))    # output tile
    scratch = 2 * _pad_tile_bytes(T, H, 4) + _pad_tile_bytes(T, HD, 4)
    vmem_limit = int(min(max(2 * (2 * streamed + scratch), 8 << 20), 100 << 20))

    kernel = functools.partial(gat_layer_kernel, num_heads=H, out_feats=D,
                               neg_slope=neg_slope)
    return pl.pallas_call(
        kernel,
        out_shape=jax.ShapeDtypeStruct((N, HD), jnp.float32),
        grid=(N // T, N // S),
        in_specs=[
            pl.BlockSpec((T, H), lambda i, j: (i, 0)),      # er   (dst tile)
            pl.BlockSpec((T, HD), lambda i, j: (i, 0)),     # res  (dst tile)
            pl.BlockSpec((H, S), lambda i, j: (0, j)),      # el rows (src tile)
            pl.BlockSpec((S, HD), lambda i, j: (j, 0)),     # feat_src bf16 (src)
            pl.BlockSpec((T, S), lambda i, j: (i, j)),      # adj int8 tile
        ],
        out_specs=pl.BlockSpec((T, HD), lambda i, j: (i, 0)),
        scratch_shapes=[pltpu.VMEM((T, H), jnp.float32),    # running max m
                        pltpu.VMEM((T, H), jnp.float32),    # running denom l
                        pltpu.VMEM((T, HD), jnp.float32)],  # running accum
        compiler_params=pltpu.CompilerParams(
            dimension_semantics=("parallel", "arbitrary"),
            vmem_limit_bytes=vmem_limit),
    )(er, res, el_rows, fs_bf, adj_i8)


def gat_layer_ref(feat, W, W_res, attn_l, attn_r, adj_in, neg_slope=0.2):
    """Pure-JAX f32 reference mirroring the PyTorch/DGL semantics."""
    N, F = feat.shape
    H, D = attn_l.shape
    feat_src = (feat @ W).reshape(N, H, D)
    el = jnp.sum(feat_src * attn_l[None], axis=-1)          # (N_src, H)
    er = jnp.sum(feat_src * attn_r[None], axis=-1)          # (N_dst, H)
    e = el[None, :, :] + er[:, None, :]                     # (dst, src, H)
    e = jnp.where(e > 0, e, neg_slope * e)                  # LeakyReLU
    mask = (adj_in > 0)[:, :, None]
    e = jnp.where(mask, e, -1e30)
    p = jnp.exp(e - e.max(axis=1, keepdims=True))
    p = jnp.where(mask, p, 0.0)
    alpha = p / p.sum(axis=1, keepdims=True)                # edge_softmax
    rst = jnp.einsum('vuh,uhd->vhd', alpha, feat_src)
    rst = rst + (feat @ W_res).reshape(N, H, D)             # residual Linear
    return rst.reshape(N, H * D)                            # flatten(1)


if __name__ == "__main__":
    key = jax.random.PRNGKey(0)
    N, F, H, D = 256, 16, 4, 8   # nodes, in_feats, num_heads, out_feats
    k1, k2, k3, k4, k5, k6 = jax.random.split(key, 6)

    gain = 2.0 ** 0.5            # nn.init.calculate_gain('relu')

    def xavier(k, shape, fan_in, fan_out):
        std = gain * (2.0 / (fan_in + fan_out)) ** 0.5
        return std * jax.random.normal(k, shape, dtype=jnp.float32)

    # fc.weight in torch is (H*D, F); we carry its transpose (F, H*D).
    W = xavier(k1, (F, H * D), F, H * D)
    W_res = xavier(k2, (F, H * D), F, H * D)   # residual Linear (in != out)
    attn_l = xavier(k3, (H, D), D, H)
    attn_r = xavier(k4, (H, D), D, H)
    feat = jax.random.normal(k5, (N, F), dtype=jnp.float32)

    # Pre-round feat/weights to bf16-representable values so the kernel's bf16
    # MXU path stays close to the f32 reference.
    rt = lambda x: x.astype(jnp.bfloat16).astype(jnp.float32)
    feat, W, W_res = rt(feat), rt(W), rt(W_res)

    # Random sparse digraph + self loops (every dst node has >= 1 in-edge).
    adj_rand = (jax.random.uniform(k6, (N, N)) < 0.2).astype(jnp.float32)
    adj_in = jnp.maximum(adj_rand, jnp.eye(N, dtype=jnp.float32))  # [dst, src]

    # Multi-tile grid: 4 dst tiles x 2 src tiles (exercises online softmax).
    out = gat_layer(feat, W, W_res, attn_l, attn_r, adj_in,
                    tile_dst=64, tile_src=128)
    jax.block_until_ready(out)

    ref = gat_layer_ref(feat, W, W_res, attn_l, attn_r, adj_in)
    assert out.shape == (N, H * D)
    max_err = float(jnp.max(jnp.abs(out - ref)))
    # Tolerance accounts for the bf16 feat_src / attention-weight aggregation
    # path (keep fs/p in f32 + approx=False reciprocal for tighter validation).
    assert jnp.allclose(out, ref, atol=1e-2, rtol=1e-2), f"mismatch: {max_err}"
    print("KERNEL_OK")
</pallas_src>

<mosaic_0001>
module attributes {stable_mosaic.version = 11 : i64} {
  func.func @gat_layer_kernel(%arg0: i32, %arg1: i32, %arg2: memref<64x4xf32, #tpu.memory_space<vmem>>, %arg3: memref<64x32xf32, #tpu.memory_space<vmem>>, %arg4: memref<4x128xf32, #tpu.memory_space<vmem>>, %arg5: memref<128x32xbf16, #tpu.memory_space<vmem>>, %arg6: memref<64x128xi8, #tpu.memory_space<vmem>>, %arg7: memref<64x32xf32, #tpu.memory_space<vmem>>, %arg8: memref<64x4xf32, #tpu.memory_space<vmem>>, %arg9: memref<64x4xf32, #tpu.memory_space<vmem>>, %arg10: memref<64x32xf32, #tpu.memory_space<vmem>>) attributes {dimension_semantics = [#tpu.dimension_semantics<parallel>, #tpu.dimension_semantics<arbitrary>], iteration_bounds = array<i64: 4, 2>, scalar_prefetch = 0 : i64, scratch_operands = 3 : i64, tpu.core_type = #tpu.core_type<tc>, window_params = [{transform_indices = @transform_0, window_bounds = array<i64: 64, 4>}, {transform_indices = @transform_1, window_bounds = array<i64: 64, 32>}, {transform_indices = @transform_2, window_bounds = array<i64: 4, 128>}, {transform_indices = @transform_3, window_bounds = array<i64: 128, 32>}, {transform_indices = @transform_4, window_bounds = array<i64: 64, 128>}, {transform_indices = @transform_5, window_bounds = array<i64: 64, 32>}]} {
    %c0_i32 = arith.constant 0 : i32
    %0 = arith.cmpi eq, %arg1, %c0_i32 : i32
    %1 = arith.extui %0 : i1 to i32
    %c0_i32_0 = arith.constant 0 : i32
    %2 = arith.cmpi ne, %1, %c0_i32_0 : i32
    scf.if %2 {
      %cst_43 = arith.constant 0xFF800000 : f32
      %148 = vector.broadcast %cst_43 : f32 to vector<64x4xf32>
      %c0_44 = arith.constant 0 : index
      %c0_45 = arith.constant 0 : index
      %149 = vector.load %arg8[%c0_44, %c0_45] : memref<64x4xf32, #tpu.memory_space<vmem>>, vector<64x4xf32>
      tpu.vector_store %arg8[%c0_44, %c0_45], %148 {strides = array<i32>} : memref<64x4xf32, #tpu.memory_space<vmem>>, vector<64x4xf32>,
      %cst_46 = arith.constant 0.000000e+00 : f32
      %150 = vector.broadcast %cst_46 : f32 to vector<64x4xf32>
      %c0_47 = arith.constant 0 : index
      %c0_48 = arith.constant 0 : index
      %151 = vector.load %arg9[%c0_47, %c0_48] : memref<64x4xf32, #tpu.memory_space<vmem>>, vector<64x4xf32>
      tpu.vector_store %arg9[%c0_47, %c0_48], %150 {strides = array<i32>} : memref<64x4xf32, #tpu.memory_space<vmem>>, vector<64x4xf32>,
      %cst_49 = arith.constant 0.000000e+00 : f32
      %152 = vector.broadcast %cst_49 : f32 to vector<64x32xf32>
      %c0_50 = arith.constant 0 : index
      %c0_51 = arith.constant 0 : index
      %153 = vector.load %arg10[%c0_50, %c0_51] : memref<64x32xf32, #tpu.memory_space<vmem>>, vector<64x32xf32>
      tpu.vector_store %arg10[%c0_50, %c0_51], %152 {strides = array<i32>} : memref<64x32xf32, #tpu.memory_space<vmem>>, vector<64x32xf32>,
    } else {
    }
    %c0 = arith.constant 0 : index
    %c0_1 = arith.constant 0 : index
    %3 = vector.load %arg6[%c0, %c0_1] : memref<64x128xi8, #tpu.memory_space<vmem>>, vector<64x128xi8>
    %c0_i8 = arith.constant 0 : i8
    %4 = vector.broadcast %c0_i8 : i8 to vector<64x128xi8>
    %5 = arith.cmpi ne, %3, %4 : vector<64x128xi8>
    %c0_2 = arith.constant 0 : index
    %c0_3 = arith.constant 0 : index
    %6 = vector.load %arg2[%c0_2, %c0_3] : memref<64x4xf32, #tpu.memory_space<vmem>>, vector<64x4xf32>
    %c0_4 = arith.constant 0 : index
    %c0_5 = arith.constant 0 : index
    %7 = vector.load %arg4[%c0_4, %c0_5] : memref<4x128xf32, #tpu.memory_space<vmem>>, vector<4x128xf32>
    %c0_6 = arith.constant 0 : index
    %c0_7 = arith.constant 0 : index
    %8 = vector.load %arg5[%c0_6, %c0_7] : memref<128x32xbf16, #tpu.memory_space<vmem>>, vector<128x32xbf16>
    %c0_8 = arith.constant 0 : index
    %c0_9 = arith.constant 0 : index
    %9 = vector.load %arg8[%c0_8, %c0_9] : memref<64x4xf32, #tpu.memory_space<vmem>>, vector<64x4xf32>
    %c0_10 = arith.constant 0 : index
    %c0_11 = arith.constant 0 : index
    %10 = vector.load %arg9[%c0_10, %c0_11] : memref<64x4xf32, #tpu.memory_space<vmem>>, vector<64x4xf32>
    %11 = vector.extract_strided_slice %6 {offsets = [0, 0], sizes = [64, 1], strides = [1, 1]} : vector<64x4xf32> to vector<64x1xf32>
    %12 = vector.extract_strided_slice %7 {offsets = [0, 0], sizes = [1, 128], strides = [1, 1]} : vector<4x128xf32> to vector<1x128xf32>
    %13 = vector.broadcast %11 : vector<64x1xf32> to vector<64x128xf32>
    %14 = vector.broadcast %12 : vector<1x128xf32> to vector<64x128xf32>
    %15 = arith.addf %13, %14 : vector<64x128xf32>
    %cst = arith.constant 2.000000e-01 : f32
    %16 = vector.broadcast %cst : f32 to vector<64x128xf32>
    %17 = arith.mulf %16, %15 : vector<64x128xf32>
    %18 = arith.maximumf %15, %17 : vector<64x128xf32>
    %cst_12 = arith.constant -1.000000e+30 : f32
    %19 = vector.broadcast %cst_12 : f32 to vector<64x128xf32>
    %20 = arith.select %5, %18, %19 : vector<64x128xi1>, vector<64x128xf32>
    %21 = vector.extract_strided_slice %9 {offsets = [0, 0], sizes = [64, 1], strides = [1, 1]} : vector<64x4xf32> to vector<64x1xf32>
    %cst_13 = arith.constant dense<0xFF800000> : vector<64xf32>
    %22 = vector.multi_reduction <maximumf>, %20, %cst_13 [1] : vector<64x128xf32> to vector<64xf32>
    %23 = vector.shape_cast %22 : vector<64xf32> to vector<64x1xf32>
    %24 = arith.maximumf %21, %23 : vector<64x1xf32>
    %25 = vector.extract_strided_slice %9 {offsets = [0, 0], sizes = [64, 1], strides = [1, 1]} : vector<64x4xf32> to vector<64x1xf32>
    %26 = arith.subf %25, %24 : vector<64x1xf32>
    %27 = math.exp %26 : vector<64x1xf32>
    %28 = vector.broadcast %24 : vector<64x1xf32> to vector<64x128xf32>
    %29 = arith.subf %20, %28 : vector<64x128xf32>
    %30 = math.exp %29 : vector<64x128xf32>
    %31 = vector.extract_strided_slice %10 {offsets = [0, 0], sizes = [64, 1], strides = [1, 1]} : vector<64x4xf32> to vector<64x1xf32>
    %32 = arith.mulf %27, %31 : vector<64x1xf32>
    %cst_14 = arith.constant dense<0.000000e+00> : vector<64xf32>
    %33 = vector.multi_reduction <add>, %30, %cst_14 [1] : vector<64x128xf32> to vector<64xf32>
    %34 = vector.shape_cast %33 : vector<64xf32> to vector<64x1xf32>
    %35 = arith.addf %32, %34 : vector<64x1xf32>
    %36 = arith.truncf %30 : vector<64x128xf32> to vector<64x128xbf16>
    %37 = vector.extract_strided_slice %8 {offsets = [0, 0], sizes = [128, 8], strides = [1, 1]} : vector<128x32xbf16> to vector<128x8xbf16>
    %cst_15 = arith.constant dense<0.000000e+00> : vector<64x8xf32>
    %38 = tpu.matmul %36, %37, %cst_15 {dimension_numbers = #tpu.dot_dimension_numbers<[1], [0], [0], [1], [0, 0, 1, 1], [], []>} : vector<64x128xbf16>, vector<128x8xbf16>, vector<64x8xf32> -> vector<64x8xf32>
    %c0_16 = arith.constant 0 : index
    %c0_17 = arith.constant 0 : index
    %39 = vector.load %arg10[%c0_16, %c0_17] : memref<64x32xf32, #tpu.memory_space<vmem>>, vector<64x8xf32>
    %40 = vector.broadcast %27 : vector<64x1xf32> to vector<64x8xf32>
    %41 = arith.mulf %40, %39 : vector<64x8xf32>
    %42 = arith.addf %41, %38 : vector<64x8xf32>
    %43 = vector.extract_strided_slice %6 {offsets = [0, 1], sizes = [64, 1], strides = [1, 1]} : vector<64x4xf32> to vector<64x1xf32>
    %44 = vector.extract_strided_slice %7 {offsets = [1, 0], sizes = [1, 128], strides = [1, 1]} : vector<4x128xf32> to vector<1x128xf32>
    %45 = vector.broadcast %43 : vector<64x1xf32> to vector<64x128xf32>
    %46 = vector.broadcast %44 : vector<1x128xf32> to vector<64x128xf32>
    %47 = arith.addf %45, %46 : vector<64x128xf32>
    %cst_18 = arith.constant 2.000000e-01 : f32
    %48 = vector.broadcast %cst_18 : f32 to vector<64x128xf32>
    %49 = arith.mulf %48, %47 : vector<64x128xf32>
    %50 = arith.maximumf %47, %49 : vector<64x128xf32>
    %cst_19 = arith.constant -1.000000e+30 : f32
    %51 = vector.broadcast %cst_19 : f32 to vector<64x128xf32>
    %52 = arith.select %5, %50, %51 : vector<64x128xi1>, vector<64x128xf32>
    %53 = vector.extract_strided_slice %9 {offsets = [0, 1], sizes = [64, 1], strides = [1, 1]} : vector<64x4xf32> to vector<64x1xf32>
    %cst_20 = arith.constant dense<0xFF800000> : vector<64xf32>
    %54 = vector.multi_reduction <maximumf>, %52, %cst_20 [1] : vector<64x128xf32> to vector<64xf32>
    %55 = vector.shape_cast %54 : vector<64xf32> to vector<64x1xf32>
    %56 = arith.maximumf %53, %55 : vector<64x1xf32>
    %57 = vector.extract_strided_slice %9 {offsets = [0, 1], sizes = [64, 1], strides = [1, 1]} : vector<64x4xf32> to vector<64x1xf32>
    %58 = arith.subf %57, %56 : vector<64x1xf32>
    %59 = math.exp %58 : vector<64x1xf32>
    %60 = vector.broadcast %56 : vector<64x1xf32> to vector<64x128xf32>
    %61 = arith.subf %52, %60 : vector<64x128xf32>
    %62 = math.exp %61 : vector<64x128xf32>
    %63 = vector.extract_strided_slice %10 {offsets = [0, 1], sizes = [64, 1], strides = [1, 1]} : vector<64x4xf32> to vector<64x1xf32>
    %64 = arith.mulf %59, %63 : vector<64x1xf32>
    %cst_21 = arith.constant dense<0.000000e+00> : vector<64xf32>
    %65 = vector.multi_reduction <add>, %62, %cst_21 [1] : vector<64x128xf32> to vector<64xf32>
    %66 = vector.shape_cast %65 : vector<64xf32> to vector<64x1xf32>
    %67 = arith.addf %64, %66 : vector<64x1xf32>
    %68 = arith.truncf %62 : vector<64x128xf32> to vector<64x128xbf16>
    %69 = vector.extract_strided_slice %8 {offsets = [0, 8], sizes = [128, 8], strides = [1, 1]} : vector<128x32xbf16> to vector<128x8xbf16>
    %cst_22 = arith.constant dense<0.000000e+00> : vector<64x8xf32>
    %70 = tpu.matmul %68, %69, %cst_22 {dimension_numbers = #tpu.dot_dimension_numbers<[1], [0], [0], [1], [0, 0, 1, 1], [], []>} : vector<64x128xbf16>, vector<128x8xbf16>, vector<64x8xf32> -> vector<64x8xf32>
    %c0_23 = arith.constant 0 : index
    %c8 = arith.constant 8 : index
    %71 = vector.load %arg10[%c0_23, %c8] : memref<64x32xf32, #tpu.memory_space<vmem>>, vector<64x8xf32>
    %72 = vector.broadcast %59 : vector<64x1xf32> to vector<64x8xf32>
    %73 = arith.mulf %72, %71 : vector<64x8xf32>
    %74 = arith.addf %73, %70 : vector<64x8xf32>
    %75 = vector.extract_strided_slice %6 {offsets = [0, 2], sizes = [64, 1], strides = [1, 1]} : vector<64x4xf32> to vector<64x1xf32>
    %76 = vector.extract_strided_slice %7 {offsets = [2, 0], sizes = [1, 128], strides = [1, 1]} : vector<4x128xf32> to vector<1x128xf32>
    %77 = vector.broadcast %75 : vector<64x1xf32> to vector<64x128xf32>
    %78 = vector.broadcast %76 : vector<1x128xf32> to vector<64x128xf32>
    %79 = arith.addf %77, %78 : vector<64x128xf32>
    %cst_24 = arith.constant 2.000000e-01 : f32
    %80 = vector.broadcast %cst_24 : f32 to vector<64x128xf32>
    %81 = arith.mulf %80, %79 : vector<64x128xf32>
    %82 = arith.maximumf %79, %81 : vector<64x128xf32>
    %cst_25 = arith.constant -1.000000e+30 : f32
    %83 = vector.broadcast %cst_25 : f32 to vector<64x128xf32>
    %84 = arith.select %5, %82, %83 : vector<64x128xi1>, vector<64x128xf32>
    %85 = vector.extract_strided_slice %9 {offsets = [0, 2], sizes = [64, 1], strides = [1, 1]} : vector<64x4xf32> to vector<64x1xf32>
    %cst_26 = arith.constant dense<0xFF800000> : vector<64xf32>
    %86 = vector.multi_reduction <maximumf>, %84, %cst_26 [1] : vector<64x128xf32> to vector<64xf32>
    %87 = vector.shape_cast %86 : vector<64xf32> to vector<64x1xf32>
    %88 = arith.maximumf %85, %87 : vector<64x1xf32>
    %89 = vector.extract_strided_slice %9 {offsets = [0, 2], sizes = [64, 1], strides = [1, 1]} : vector<64x4xf32> to vector<64x1xf32>
    %90 = arith.subf %89, %88 : vector<64x1xf32>
    %91 = math.exp %90 : vector<64x1xf32>
    %92 = vector.broadcast %88 : vector<64x1xf32> to vector<64x128xf32>
    %93 = arith.subf %84, %92 : vector<64x128xf32>
    %94 = math.exp %93 : vector<64x128xf32>
    %95 = vector.extract_strided_slice %10 {offsets = [0, 2], sizes = [64, 1], strides = [1, 1]} : vector<64x4xf32> to vector<64x1xf32>
    %96 = arith.mulf %91, %95 : vector<64x1xf32>
    %cst_27 = arith.constant dense<0.000000e+00> : vector<64xf32>
    %97 = vector.multi_reduction <add>, %94, %cst_27 [1] : vector<64x128xf32> to vector<64xf32>
    %98 = vector.shape_cast %97 : vector<64xf32> to vector<64x1xf32>
    %99 = arith.addf %96, %98 : vector<64x1xf32>
    %100 = arith.truncf %94 : vector<64x128xf32> to vector<64x128xbf16>
    %101 = vector.extract_strided_slice %8 {offsets = [0, 16], sizes = [128, 8], strides = [1, 1]} : vector<128x32xbf16> to vector<128x8xbf16>
    %cst_28 = arith.constant dense<0.000000e+00> : vector<64x8xf32>
    %102 = tpu.matmul %100, %101, %cst_28 {dimension_numbers = #tpu.dot_dimension_numbers<[1], [0], [0], [1], [0, 0, 1, 1], [], []>} : vector<64x128xbf16>, vector<128x8xbf16>, vector<64x8xf32> -> vector<64x8xf32>
    %c0_29 = arith.constant 0 : index
    %c16 = arith.constant 16 : index
    %103 = vector.load %arg10[%c0_29, %c16] : memref<64x32xf32, #tpu.memory_space<vmem>>, vector<64x8xf32>
    %104 = vector.broadcast %91 : vector<64x1xf32> to vector<64x8xf32>
    %105 = arith.mulf %104, %103 : vector<64x8xf32>
    %106 = arith.addf %105, %102 : vector<64x8xf32>
    %107 = vector.extract_strided_slice %6 {offsets = [0, 3], sizes = [64, 1], strides = [1, 1]} : vector<64x4xf32> to vector<64x1xf32>
    %108 = vector.extract_strided_slice %7 {offsets = [3, 0], sizes = [1, 128], strides = [1, 1]} : vector<4x128xf32> to vector<1x128xf32>
    %109 = vector.broadcast %107 : vector<64x1xf32> to vector<64x128xf32>
    %110 = vector.broadcast %108 : vector<1x128xf32> to vector<64x128xf32>
    %111 = arith.addf %109, %110 : vector<64x128xf32>
    %cst_30 = arith.constant 2.000000e-01 : f32
    %112 = vector.broadcast %cst_30 : f32 to vector<64x128xf32>
    %113 = arith.mulf %112, %111 : vector<64x128xf32>
    %114 = arith.maximumf %111, %113 : vector<64x128xf32>
    %cst_31 = arith.constant -1.000000e+30 : f32
    %115 = vector.broadcast %cst_31 : f32 to vector<64x128xf32>
    %116 = arith.select %5, %114, %115 : vector<64x128xi1>, vector<64x128xf32>
    %117 = vector.extract_strided_slice %9 {offsets = [0, 3], sizes = [64, 1], strides = [1, 1]} : vector<64x4xf32> to vector<64x1xf32>
    %cst_32 = arith.constant dense<0xFF800000> : vector<64xf32>
    %118 = vector.multi_reduction <maximumf>, %116, %cst_32 [1] : vector<64x128xf32> to vector<64xf32>
    %119 = vector.shape_cast %118 : vector<64xf32> to vector<64x1xf32>
    %120 = arith.maximumf %117, %119 : vector<64x1xf32>
    %121 = vector.extract_strided_slice %9 {offsets = [0, 3], sizes = [64, 1], strides = [1, 1]} : vector<64x4xf32> to vector<64x1xf32>
    %122 = arith.subf %121, %120 : vector<64x1xf32>
    %123 = math.exp %122 : vector<64x1xf32>
    %124 = vector.broadcast %120 : vector<64x1xf32> to vector<64x128xf32>
    %125 = arith.subf %116, %124 : vector<64x128xf32>
    %126 = math.exp %125 : vector<64x128xf32>
    %127 = vector.extract_strided_slice %10 {offsets = [0, 3], sizes = [64, 1], strides = [1, 1]} : vector<64x4xf32> to vector<64x1xf32>
    %128 = arith.mulf %123, %127 : vector<64x1xf32>
    %cst_33 = arith.constant dense<0.000000e+00> : vector<64xf32>
    %129 = vector.multi_reduction <add>, %126, %cst_33 [1] : vector<64x128xf32> to vector<64xf32>
    %130 = vector.shape_cast %129 : vector<64xf32> to vector<64x1xf32>
    %131 = arith.addf %128, %130 : vector<64x1xf32>
    %132 = arith.truncf %126 : vector<64x128xf32> to vector<64x128xbf16>
    %133 = vector.extract_strided_slice %8 {offsets = [0, 24], sizes = [128, 8], strides = [1, 1]} : vector<128x32xbf16> to vector<128x8xbf16>
    %cst_34 = arith.constant dense<0.000000e+00> : vector<64x8xf32>
    %134 = tpu.matmul %132, %133, %cst_34 {dimension_numbers = #tpu.dot_dimension_numbers<[1], [0], [0], [1], [0, 0, 1, 1], [], []>} : vector<64x128xbf16>, vector<128x8xbf16>, vector<64x8xf32> -> vector<64x8xf32>
    %c0_35 = arith.constant 0 : index
    %c24 = arith.constant 24 : index
    %135 = vector.load %arg10[%c0_35, %c24] : memref<64x32xf32, #tpu.memory_space<vmem>>, vector<64x8xf32>
    %136 = vector.broadcast %123 : vector<64x1xf32> to vector<64x8xf32>
    %137 = arith.mulf %136, %135 : vector<64x8xf32>
    %138 = arith.addf %137, %134 : vector<64x8xf32>
    %139 = tpu.concatenate %24, %56, %88, %120 in 1 : vector<64x1xf32>, vector<64x1xf32>, vector<64x1xf32>, vector<64x1xf32> -> vector<64x4xf32>
    %c0_36 = arith.constant 0 : index
    %c0_37 = arith.constant 0 : index
    %140 = vector.load %arg8[%c0_36, %c0_37] : memref<64x4xf32, #tpu.memory_space<vmem>>, vector<64x4xf32>
    tpu.vector_store %arg8[%c0_36, %c0_37], %139 {strides = array<i32>} : memref<64x4xf32, #tpu.memory_space<vmem>>, vector<64x4xf32>,
    %141 = tpu.concatenate %35, %67, %99, %131 in 1 : vector<64x1xf32>, vector<64x1xf32>, vector<64x1xf32>, vector<64x1xf32> -> vector<64x4xf32>
    %c0_38 = arith.constant 0 : index
    %c0_39 = arith.constant 0 : index
    %142 = vector.load %arg9[%c0_38, %c0_39] : memref<64x4xf32, #tpu.memory_space<vmem>>, vector<64x4xf32>
    tpu.vector_store %arg9[%c0_38, %c0_39], %141 {strides = array<i32>} : memref<64x4xf32, #tpu.memory_space<vmem>>, vector<64x4xf32>,
    %143 = tpu.concatenate %42, %74, %106, %138 in 1 : vector<64x8xf32>, vector<64x8xf32>, vector<64x8xf32>, vector<64x8xf32> -> vector<64x32xf32>
    %c0_40 = arith.constant 0 : index
    %c0_41 = arith.constant 0 : index
    %144 = vector.load %arg10[%c0_40, %c0_41] : memref<64x32xf32, #tpu.memory_space<vmem>>, vector<64x32xf32>
    tpu.vector_store %arg10[%c0_40, %c0_41], %143 {strides = array<i32>} : memref<64x32xf32, #tpu.memory_space<vmem>>, vector<64x32xf32>,
    %c1_i32 = arith.constant 1 : i32
    %145 = arith.cmpi eq, %arg1, %c1_i32 : i32
    %146 = arith.extui %145 : i1 to i32
    %c0_i32_42 = arith.constant 0 : i32
    %147 = arith.cmpi ne, %146, %c0_i32_42 : i32
    scf.if %147 {
      %c0_43 = arith.constant 0 : index
      %c0_44 = arith.constant 0 : index
      %148 = vector.load %arg9[%c0_43, %c0_44] : memref<64x4xf32, #tpu.memory_space<vmem>>, vector<64x4xf32>
      %149 = tpu.reciprocal %148 {approx = true} : vector<64x4xf32> -> vector<64x4xf32>
      %c0_45 = arith.constant 0 : index
      %c0_46 = arith.constant 0 : index
      %150 = vector.load %arg10[%c0_45, %c0_46] : memref<64x32xf32, #tpu.memory_space<vmem>>, vector<64x8xf32>
      %151 = vector.extract_strided_slice %149 {offsets = [0, 0], sizes = [64, 1], strides = [1, 1]} : vector<64x4xf32> to vector<64x1xf32>
      %152 = vector.broadcast %151 : vector<64x1xf32> to vector<64x8xf32>
      %153 = arith.mulf %150, %152 : vector<64x8xf32>
      %c0_47 = arith.constant 0 : index
      %c8_48 = arith.constant 8 : index
      %154 = vector.load %arg10[%c0_47, %c8_48] : memref<64x32xf32, #tpu.memory_space<vmem>>, vector<64x8xf32>
      %155 = vector.extract_strided_slice %149 {offsets = [0, 1], sizes = [64, 1], strides = [1, 1]} : vector<64x4xf32> to vector<64x1xf32>
      %156 = vector.broadcast %155 : vector<64x1xf32> to vector<64x8xf32>
      %157 = arith.mulf %154, %156 : vector<64x8xf32>
      %c0_49 = arith.constant 0 : index
      %c16_50 = arith.constant 16 : index
      %158 = vector.load %arg10[%c0_49, %c16_50] : memref<64x32xf32, #tpu.memory_space<vmem>>, vector<64x8xf32>
      %159 = vector.extract_strided_slice %149 {offsets = [0, 2], sizes = [64, 1], strides = [1, 1]} : vector<64x4xf32> to vector<64x1xf32>
      %160 = vector.broadcast %159 : vector<64x1xf32> to vector<64x8xf32>
      %161 = arith.mulf %158, %160 : vector<64x8xf32>
      %c0_51 = arith.constant 0 : index
      %c24_52 = arith.constant 24 : index
      %162 = vector.load %arg10[%c0_51, %c24_52] : memref<64x32xf32, #tpu.memory_space<vmem>>, vector<64x8xf32>
      %163 = vector.extract_strided_slice %149 {offsets = [0, 3], sizes = [64, 1], strides = [1, 1]} : vector<64x4xf32> to vector<64x1xf32>
      %164 = vector.broadcast %163 : vector<64x1xf32> to vector<64x8xf32>
      %165 = arith.mulf %162, %164 : vector<64x8xf32>
      %166 = tpu.concatenate %153, %157, %161, %165 in 1 : vector<64x8xf32>, vector<64x8xf32>, vector<64x8xf32>, vector<64x8xf32> -> vector<64x32xf32>
      %c0_53 = arith.constant 0 : index
      %c0_54 = arith.constant 0 : index
      %167 = vector.load %arg3[%c0_53, %c0_54] : memref<64x32xf32, #tpu.memory_space<vmem>>, vector<64x32xf32>
      %168 = arith.addf %166, %167 : vector<64x32xf32>
      %c0_55 = arith.constant 0 : index
      %c0_56 = arith.constant 0 : index
      %169 = vector.load %arg7[%c0_55, %c0_56] : memref<64x32xf32, #tpu.memory_space<vmem>>, vector<64x32xf32>
      tpu.vector_store %arg7[%c0_55, %c0_56], %168 {strides = array<i32>} : memref<64x32xf32, #tpu.memory_space<vmem>>, vector<64x32xf32>,
    } else {
    }
    return
  }
  func.func @transform_0(%arg0: i32, %arg1: i32) -> (i32, i32) {
    %c0_i32 = arith.constant 0 : i32
    %c0_i32_0 = arith.constant 0 : i32
    return %arg0, %c0_i32 : i32, i32
  }
  func.func @transform_1(%arg0: i32, %arg1: i32) -> (i32, i32) {
    %c0_i32 = arith.constant 0 : i32
    %c0_i32_0 = arith.constant 0 : i32
    return %arg0, %c0_i32 : i32, i32
  }
  func.func @transform_2(%arg0: i32, %arg1: i32) -> (i32, i32) {
    %c0_i32 = arith.constant 0 : i32
    %c0_i32_0 = arith.constant 0 : i32
    return %c0_i32, %arg1 : i32, i32
  }
  func.func @transform_3(%arg0: i32, %arg1: i32) -> (i32, i32) {
    %c0_i32 = arith.constant 0 : i32
    %c0_i32_0 = arith.constant 0 : i32
    return %arg1, %c0_i32 : i32, i32
  }
  func.func @transform_4(%arg0: i32, %arg1: i32) -> (i32, i32) {
    %c0_i32 = arith.constant 0 : i32
    return %arg0, %arg1 : i32, i32
  }
  func.func @transform_5(%arg0: i32, %arg1: i32) -> (i32, i32) {
    %c0_i32 = arith.constant 0 : i32
    %c0_i32_0 = arith.constant 0 : i32
    return %arg0, %c0_i32 : i32, i32
  }
}

</mosaic_0001>

<llo_original>
// kernel: tpu_custom_call.1
$region0: #{tpu_custom_call.1}
  #allocation0 [shape = 'u32[]', space=smem, size = 0x4, offset = 0x4, fixed_abs, tag = 'smem constant byte address 0x4 - core index']
  #allocation1 [shape = 'u32[144,128]{1,0:T(1,128)}', space=vmem, size = 0x12000, scoped, tag = 'internal scratch']
  #allocation2 [shape = 'f32[64,4]{1,0:T(8,128)}', space=vmem, size = 0x8000, scoped, tag = 'scratch operand']
  #allocation3 [shape = 'f32[64,4]{1,0:T(8,128)}', space=vmem, size = 0x8000, scoped, tag = 'scratch operand']
  #allocation4 [shape = 'f32[64,32]{1,0:T(8,128)}', space=vmem, size = 0x8000, scoped, tag = 'scratch operand']
  %s0 = inlined_call_operand.vmem [shape: f32[256,4], index: 0, kind: input, shape index: {}]
  %s1 = inlined_call_operand.vmem [shape: f32[256,32], index: 1, kind: input, shape index: {}]
  %s2 = inlined_call_operand.vmem [shape: f32[4,256], index: 2, kind: input, shape index: {}]
  %s3 = inlined_call_operand.vmem [shape: bf16[256,32], index: 3, kind: input, shape index: {}]
  %s4 = inlined_call_operand.vmem [shape: s8[256,256], index: 4, kind: input, shape index: {}]
  %s5 = inlined_call_operand.vmem [shape: f32[256,32], index: 5, kind: output, shape index: {}]
  %s6 = sld [smem:[#allocation0]]
  $region99: #{tpu_custom_call.1} parent=0
    _
  %s8 = ssub.s32 1, %s6
  %s9 = scalar_select 0, %s8, %s6
  $region1: #{tpu_custom_call.1} parent=0
    #allocation5 [shape = 'u8[16384]{0}', space=vmem, size = 0x4000, scoped, tag = 'input window, operand 4']
    loop: start=0, step=1, limit=10
    $region2: #{tpu_custom_call.1} parent=1 // loop_pre_header
      _
    $region3: #{tpu_custom_call.1} parent=1 // loop_header
      %s11 = sphi 0, %s15
      %p12 = scmp.ge.s32.totalorder %s11, 10
      %s18 = sphi 0, %s30
      %s19 = sphi 0, %s26
      %s20 = sphi 0, %s18
      %s21 = sphi 0, %s19
      %s22 = sphi 0, %s20
      %s23 = sphi 0, %s21
      %s33 = sphi 0, %s35
      %s36 = sphi 0, %s33
      %s37 = sphi 0, %s36
      %s53 = sphi 0, %s37
      %s59 = sphi 0, %s61
      %s62 = sphi 0, %s59
      %s63 = sphi 0, %s62
      %s79 = sphi 0, %s63
      %s85 = sphi 0, %s87
      %s88 = sphi 0, %s85
      %s89 = sphi 0, %s88
      %s105 = sphi 0, %s89
      %s111 = sphi 0, %s113
      %s114 = sphi 0, %s111
      %s115 = sphi 0, %s114
      %s131 = sphi 0, %s115
      %s139 = sphi 0, %s141
      %s142 = sphi 0, %s139
      %s143 = sphi 0, %s142
      %s159 = sphi 0, %s143
      %s165 = sphi 0, %s167
      %s168 = sphi 0, %s165
      %s169 = sphi 0, %s168
      %s185 = sphi 0, %s169
    $region4: #{tpu_custom_call.1} parent=1 // loop_header_branch
      %14 = sbr.rel (%p12) target = $region8
    $region5: #{tpu_custom_call.1} parent=1 // loop_body
      %s16 = ssub.s32 %s11, 1
      %s17 = ssub.s32 %s11, 2
      %s24 = sadd.s32 1, %s19
      %p25 = scmp.ge.s32.totalorder %s24, 2
      %s26 = scalar_select %p25, 0, %s24
      %s27 = sadd.s32 1, %s18
      %s28 = scalar_select %p25, %s27, %s18
      %p29 = scmp.ge.s32.totalorder %s28, 4
      %s30 = scalar_select %p29, 0, %s28
      %s31 = ssub.s32 %s18, %s30
      %p32 = scmp.eq.s32.totalorder %s31, 0
      %s34 = sadd.s32 %s33, 1
      %s35 = scalar_select %p32, %s33, %s34
      %p38 = pneg %p32
      %p39 = scmp.eq.s32.totalorder %s11, 7
      %p40 = por %p38, %p39
      %p41 = scmp.ne.s32.totalorder %s33, %s36
      %p42 = scmp.eq.s32.totalorder %s11, 0
      %p43 = por %p41, %p42
      %p44 = scmp.ne.s32.totalorder %s33, %s36
      %p45 = scmp.eq.s32.totalorder %s16, 7
      %p46 = por %p44, %p45
      %p47 = scmp.ne.s32.totalorder %s36, %s37
      %p48 = scmp.eq.s32.totalorder %s16, 0
      %p49 = por %p47, %p48
      %p50 = scmp.ne.s32.totalorder %s36, %s37
      %p51 = scmp.eq.s32.totalorder %s17, 7
      %p52 = por %p50, %p51
      %p54 = scmp.ne.s32.totalorder %s37, %s53
      %p55 = scmp.eq.s32.totalorder %s17, 0
      %p56 = por %p54, %p55
      %s57 = ssub.s32 %s18, %s30
      %p58 = scmp.eq.s32.totalorder %s57, 0
      %s60 = sadd.s32 %s59, 1
      %s61 = scalar_select %p58, %s59, %s60
      %p64 = pneg %p58
      %p65 = scmp.eq.s32.totalorder %s11, 7
      %p66 = por %p64, %p65
      %p67 = scmp.ne.s32.totalorder %s59, %s62
      %p68 = scmp.eq.s32.totalorder %s11, 0
      %p69 = por %p67, %p68
      %p70 = scmp.ne.s32.totalorder %s59, %s62
      %p71 = scmp.eq.s32.totalorder %s16, 7
      %p72 = por %p70, %p71
      %p73 = scmp.ne.s32.totalorder %s62, %s63
      %p74 = scmp.eq.s32.totalorder %s16, 0
      %p75 = por %p73, %p74
      %p76 = scmp.ne.s32.totalorder %s62, %s63
      %p77 = scmp.eq.s32.totalorder %s17, 7
      %p78 = por %p76, %p77
      %p80 = scmp.ne.s32.totalorder %s63, %s79
      %p81 = scmp.eq.s32.totalorder %s17, 0
      %p82 = por %p80, %p81
      %s83 = ssub.s32 %s19, %s26
      %p84 = scmp.eq.s32.totalorder %s83, 0
      %s86 = sadd.s32 %s85, 1
      %s87 = scalar_select %p84, %s85, %s86
      %p90 = pneg %p84
      %p91 = scmp.eq.s32.totalorder %s11, 7
      %p92 = por %p90, %p91
      %p93 = scmp.ne.s32.totalorder %s85, %s88
      %p94 = scmp.eq.s32.totalorder %s11, 0
      %p95 = por %p93, %p94
      %p96 = scmp.ne.s32.totalorder %s85, %s88
      %p97 = scmp.eq.s32.totalorder %s16, 7
      %p98 = por %p96, %p97
      %p99 = scmp.ne.s32.totalorder %s88, %s89
      %p100 = scmp.eq.s32.totalorder %s16, 0
      %p101 = por %p99, %p100
      %p102 = scmp.ne.s32.totalorder %s88, %s89
      %p103 = scmp.eq.s32.totalorder %s17, 7
      %p104 = por %p102, %p103
      %p106 = scmp.ne.s32.totalorder %s89, %s105
      %p107 = scmp.eq.s32.totalorder %s17, 0
      %p108 = por %p106, %p107
      %s109 = ssub.s32 %s19, %s26
      %p110 = scmp.eq.s32.totalorder %s109, 0
      %s112 = sadd.s32 %s111, 1
      %s113 = scalar_select %p110, %s111, %s112
      %p116 = pneg %p110
      %p117 = scmp.eq.s32.totalorder %s11, 7
      %p118 = por %p116, %p117
      %p119 = scmp.ne.s32.totalorder %s111, %s114
      %p120 = scmp.eq.s32.totalorder %s11, 0
      %p121 = por %p119, %p120
      %p122 = scmp.ne.s32.totalorder %s111, %s114
      %p123 = scmp.eq.s32.totalorder %s16, 7
      %p124 = por %p122, %p123
      %p125 = scmp.ne.s32.totalorder %s114, %s115
      %p126 = scmp.eq.s32.totalorder %s16, 0
      %p127 = por %p125, %p126
      %p128 = scmp.ne.s32.totalorder %s114, %s115
      %p129 = scmp.eq.s32.totalorder %s17, 7
      %p130 = por %p128, %p129
      %p132 = scmp.ne.s32.totalorder %s115, %s131
      %p133 = scmp.eq.s32.totalorder %s17, 0
      %p134 = por %p132, %p133
      %s135 = ssub.s32 %s18, %s30
      %s136 = ssub.s32 %s19, %s26
      %s137 = sor.u32 %s135, %s136
      %p138 = scmp.eq.s32.totalorder %s137, 0
      %s140 = sadd.s32 %s139, 1
      %s141 = scalar_select %p138, %s139, %s140
      %p144 = pneg %p138
      %p145 = scmp.eq.s32.totalorder %s11, 7
      %p146 = por %p144, %p145
      %p147 = scmp.ne.s32.totalorder %s139, %s142
      %p148 = scmp.eq.s32.totalorder %s11, 0
      %p149 = por %p147, %p148
      %p150 = scmp.ne.s32.totalorder %s139, %s142
      %p151 = scmp.eq.s32.totalorder %s16, 7
      %p152 = por %p150, %p151
      %p153 = scmp.ne.s32.totalorder %s142, %s143
      %p154 = scmp.eq.s32.totalorder %s16, 0
      %p155 = por %p153, %p154
      %p156 = scmp.ne.s32.totalorder %s142, %s143
      %p157 = scmp.eq.s32.totalorder %s17, 7
      %p158 = por %p156, %p157
      %p160 = scmp.ne.s32.totalorder %s143, %s159
      %p161 = scmp.eq.s32.totalorder %s17, 0
      %p162 = por %p160, %p161
      %s163 = ssub.s32 %s18, %s30
      %p164 = scmp.eq.s32.totalorder %s163, 0
      %s166 = sadd.s32 %s165, 1
      %s167 = scalar_select %p164, %s165, %s166
      %p170 = pneg %p164
      %p171 = scmp.eq.s32.totalorder %s11, 7
      %p172 = por %p170, %p171
      %p173 = scmp.ne.s32.totalorder %s165, %s168
      %p174 = scmp.eq.s32.totalorder %s11, 0
      %p175 = por %p173, %p174
      %p176 = scmp.ne.s32.totalorder %s165, %s168
      %p177 = scmp.eq.s32.totalorder %s16, 7
      %p178 = por %p176, %p177
      %p179 = scmp.ne.s32.totalorder %s168, %s169
      %p180 = scmp.eq.s32.totalorder %s16, 0
      %p181 = por %p179, %p180
      %p182 = scmp.ne.s32.totalorder %s168, %s169
      %p183 = scmp.eq.s32.totalorder %s17, 7
      %p184 = por %p182, %p183
      %p186 = scmp.ne.s32.totalorder %s169, %s185
      %p187 = scmp.eq.s32.totalorder %s17, 0
      %p188 = por %p186, %p187
      %p189 = scmp.le.s32.totalorder 1, %s11
      %p190 = scmp.lt.s32.totalorder %s11, 9
      %p191 = pnand %p189, %p190
      %p192 = pneg %p191
      // Predicated region
      $region9: #{tpu_custom_call.1} parent=5 // pred_check
        _
      $region10: #{tpu_custom_call.1} parent=5 // pred_check_branch
        %194 = sbr.rel (%p191) target = $region12
      $region11: #{tpu_custom_call.1} parent=5 // pred_region
        %s195 = ssub.s32 %s11, 1
      $region12: #{tpu_custom_call.1} parent=5 // pred_fallthru
        _
      %p196 = scmp.lt.s32.totalorder %s11, 8
      // Predicated region
      $region13: #{tpu_custom_call.1} parent=5 // pred_check
        %p197 = pneg %p196
      $region14: #{tpu_custom_call.1} parent=5 // pred_check_branch
        %199 = sbr.rel (%p197) target = $region16
      $region15: #{tpu_custom_call.1} parent=5 // pred_region
        // Predicated region
        $region17: #{tpu_custom_call.1} parent=15 // pred_check
          %p200 = pneg %p43
        $region18: #{tpu_custom_call.1} parent=15 // pred_check_branch
          %202 = sbr.rel (%p200) target = $region20
        $region19: #{tpu_custom_call.1} parent=15 // pred_region
          %s203 = smul.u32 8, %s18
          %p204 = scmp.lt.s32.totalorder %s203, 31
          %s205 = scalar_select %p204, %s203, 31
          %s206 = smul.addr %s205, 8
          %s207 = scalar_lea.vmem %s0, %s206
          %s208 = smul.u32 8, %s18
        $region20: #{tpu_custom_call.1} parent=15 // pred_fallthru
          _
        // Predicated region
        $region21: #{tpu_custom_call.1} parent=15 // pred_check
          %p209 = pneg %p69
        $region22: #{tpu_custom_call.1} parent=15 // pred_check_branch
          %211 = sbr.rel (%p209) target = $region24
        $region23: #{tpu_custom_call.1} parent=15 // pred_region
          %s212 = smul.u32 8, %s18
          %p213 = scmp.lt.s32.totalorder %s212, 31
          %s214 = scalar_select %p213, %s212, 31
          %s215 = smul.addr %s214, 8
          %s216 = scalar_lea.vmem %s1, %s215
          %s217 = smul.u32 8, %s18
        $region24: #{tpu_custom_call.1} parent=15 // pred_fallthru
          _
        // Predicated region
        $region25: #{tpu_custom_call.1} parent=15 // pred_check
          %p218 = pneg %p95
        $region26: #{tpu_custom_call.1} parent=15 // pred_check_branch
          %220 = sbr.rel (%p218) target = $region28
        $region27: #{tpu_custom_call.1} parent=15 // pred_region
          %p221 = scmp.lt.s32.totalorder %s19, 1
          %s222 = scalar_select %p221, %s19, 1
          %s223 = smul.addr %s222, 4
          %s224 = scalar_lea.vmem %s2, %s223
        $region28: #{tpu_custom_call.1} parent=15 // pred_fallthru
          _
        // Predicated region
        $region29: #{tpu_custom_call.1} parent=15 // pred_check
          %p225 = pneg %p121
        $region30: #{tpu_custom_call.1} parent=15 // pred_check_branch
          %227 = sbr.rel (%p225) target = $region32
        $region31: #{tpu_custom_call.1} parent=15 // pred_region
          %s228 = smul.u32 16, %s19
          %p229 = scmp.lt.s32.totalorder %s228, 31
          %s230 = scalar_select %p229, %s228, 31
          %s231 = smul.addr %s230, 4
          %s232 = scalar_lea.vmem %s3, %s231
          %s233 = smul.u32 16, %s19
        $region32: #{tpu_custom_call.1} parent=15 // pred_fallthru
          _
        // Predicated region
        $region33: #{tpu_custom_call.1} parent=15 // pred_check
          %p234 = pneg %p149
        $region34: #{tpu_custom_call.1} parent=15 // pred_check_branch
          %236 = sbr.rel (%p234) target = $region36
        $region35: #{tpu_custom_call.1} parent=15 // pred_region
          %s237 = sand.u32 %s139, 1
          %s238 = sand.u32 %s139, 1
          %s239 = smul.addr %s238, 16
          %s240 = scalar_lea.vmem [#allocation5], %s239
          %s241 = smul.u32 2, %s18
          %s242 = smul.addr %s241, 2
          %s243 = sadd.s32 %s19, %s242
          %s244 = smul.addr %s243, 8
          %s245 = scalar_lea.vmem %s4, %s244
          // Predicated region
          $region37: #{tpu_custom_call.1} parent=35 // pred_check
            _
          $region38: #{tpu_custom_call.1} parent=35 // pred_check_branch
            %247 = sbr.rel (0) target = $region40
          $region39: #{tpu_custom_call.1} parent=35 // pred_region
            // Predicated region
            $region41: #{tpu_custom_call.1} parent=39 // pred_check
              _
            $region42: #{tpu_custom_call.1} parent=39 // pred_check_branch
              %249 = sbr.rel (0) target = $region44
            $region43: #{tpu_custom_call.1} parent=39 // pred_region
              // Predicated region
              $region56: #{tpu_custom_call.1} parent=43 // pred_check
                _
              $region57: #{tpu_custom_call.1} parent=43 // pred_check_branch
                %266 = sbr.rel (0) target = $region59
              $region58: #{tpu_custom_call.1} parent=43 // pred_region
                loop: start=0, step=1, limit=1
                $region60: #{tpu_custom_call.1} parent=58 // loop_pre_header
                  _
                $region61: #{tpu_custom_call.1} parent=58 // loop_header
                  %s268 = sphi 0, %s272
                  %p269 = scmp.ge.s32.totalorder %s268, 1
                  %s273 = sphi %s245, %s245
                  %s274 = sphi %s240, %s240
                $region62: #{tpu_custom_call.1} parent=58 // loop_header_branch
                  %271 = sbr.rel (%p269) target = $region66
                $region63: #{tpu_custom_call.1} parent=58 // loop_body
                  %v275 = vld [vmem:[%s273] sm:$0xff]
                  %276 = vst [vmem:[%s274] sm:$0xff] %v275
                  %v277 = vld [vmem:[%s273 + $0x10] sm:$0xff]
                  %278 = vst [vmem:[%s274 + $0x8] sm:$0xff] %v277
                $region64: #{tpu_custom_call.1} parent=58 // loop_footer
                  %s272 = sadd.s32 1, %s268
                $region65: #{tpu_custom_call.1} parent=58 // loop_footer_branch
                  %267 = sbr.rel target = $region61
                $region66: #{tpu_custom_call.1} parent=58 // loop_exit
                  _
              $region59: #{tpu_custom_call.1} parent=43 // pred_fallthru
                _
              // Predicated region
              $region67: #{tpu_custom_call.1} parent=43 // pred_check
                _
              $region68: #{tpu_custom_call.1} parent=43 // pred_check_branch
                %280 = sbr.rel target = $region70
              $region69: #{tpu_custom_call.1} parent=43 // pred_region
                _
              $region70: #{tpu_custom_call.1} parent=43 // pred_fallthru
                _
            $region44: #{tpu_custom_call.1} parent=39 // pred_fallthru
              _
            // Predicated region
            $region45: #{tpu_custom_call.1} parent=39 // pred_check
              _
            $region46: #{tpu_custom_call.1} parent=39 // pred_check_branch
              %251 = sbr.rel target = $region48
            $region47: #{tpu_custom_call.1} parent=39 // pred_region
              loop: start=0, step=1, limit=1
              $region49: #{tpu_custom_call.1} parent=47 // loop_pre_header
                _
              $region50: #{tpu_custom_call.1} parent=47 // loop_header
                %s254 = sphi 0, %s258
                %p255 = scmp.ge.s32.totalorder %s254, 1
                %s259 = sphi %s245, %s245
                %s260 = sphi %s240, %s240
              $region51: #{tpu_custom_call.1} parent=47 // loop_header_branch
                %257 = sbr.rel (%p255) target = $region55
              $region52: #{tpu_custom_call.1} parent=47 // loop_body
                %v261 = vld [vmem:[%s259] sm:$0xff]
                %262 = vst [vmem:[%s260] sm:$0xff] %v261
                %v263 = vld [vmem:[%s259 + $0x10] sm:$0xff]
                %264 = vst [vmem:[%s260 + $0x8] sm:$0xff] %v263
              $region53: #{tpu_custom_call.1} parent=47 // loop_footer
                %s258 = sadd.s32 1, %s254
              $region54: #{tpu_custom_call.1} parent=47 // loop_footer_branch
                %253 = sbr.rel target = $region50
              $region55: #{tpu_custom_call.1} parent=47 // loop_exit
                _
            $region48: #{tpu_custom_call.1} parent=39 // pred_fallthru
              _
          $region40: #{tpu_custom_call.1} parent=35 // pred_fallthru
            _
          %281 = vnop
        $region36: #{tpu_custom_call.1} parent=15 // pred_fallthru
          _
      $region16: #{tpu_custom_call.1} parent=5 // pred_fallthru
        _
      %p282 = scmp.le.s32.totalorder 1, %s11
      %p283 = scmp.lt.s32.totalorder %s11, 9
      %p284 = pnand %p282, %p283
      %p285 = pneg %p284
      // Predicated region
      $region71: #{tpu_custom_call.1} parent=5 // pred_check
        _
      $region72: #{tpu_custom_call.1} parent=5 // pred_check_branch
        %287 = sbr.rel (%p284) target = $region74
      $region73: #{tpu_custom_call.1} parent=5 // pred_region
        %s288 = ssub.s32 %s11, 1
        %s289 = sand.u32 %s142, 1
        %s290 = sand.u32 %s142, 1
        %s291 = smul.addr %s290, 16
        %s292 = scalar_lea.vmem [#allocation5], %s291
        // Predicated region
        $region75: #{tpu_custom_call.1} parent=73 // pred_check
          %p293 = pneg %p155
        $region76: #{tpu_custom_call.1} parent=73 // pred_check_branch
          %295 = sbr.rel (%p293) target = $region78
        $region77: #{tpu_custom_call.1} parent=73 // pred_region
          _
        $region78: #{tpu_custom_call.1} parent=73 // pred_fallthru
          _
        %s296 = smul.u32 8, %s20
        %p297 = scmp.lt.s32.totalorder %s296, 31
        %s298 = scalar_select %p297, %s296, 31
        %s299 = smul.addr %s298, 8
        %s300 = scalar_lea.vmem %s0, %s299
        %p301 = pneg %p49
        %p302 = pneg %p46
        %s303 = smul.u32 8, %s20
        %p304 = scmp.lt.s32.totalorder %s303, 31
        %s305 = scalar_select %p304, %s303, 31
        %s306 = smul.addr %s305, 8
        %s307 = scalar_lea.vmem %s1, %s306
        %p308 = pneg %p75
        %p309 = pneg %p72
        %p310 = scmp.lt.s32.totalorder %s21, 1
        %s311 = scalar_select %p310, %s21, 1
        %s312 = smul.addr %s311, 4
        %s313 = scalar_lea.vmem %s2, %s312
        %p314 = pneg %p101
        %p315 = pneg %p98
        %s316 = smul.u32 16, %s21
        %p317 = scmp.lt.s32.totalorder %s316, 31
        %s318 = scalar_select %p317, %s316, 31
        %s319 = smul.addr %s318, 4
        %s320 = scalar_lea.vmem %s3, %s319
        %p321 = pneg %p127
        %p322 = pneg %p124
        %s323 = sand.u32 %s142, 1
        %s324 = sand.u32 %s142, 1
        %s325 = smul.addr %s324, 16
        %s326 = scalar_lea.vmem [#allocation5], %s325
        %p327 = pneg %p155
        %p328 = pneg %p152
        %p329 = pneg %p181
        %p330 = pneg %p178
        %s331 = smul.u32 8, %s20
        %p332 = scmp.lt.s32.totalorder %s331, 31
        %s333 = scalar_select %p332, %s331, 31
        %s334 = smul.addr %s333, 8
        %s335 = scalar_lea.vmem %s5, %s334
        %s336 = smul.u32 8, %s20
        %p337 = scmp.lt.s32.totalorder %s336, 31
        %s338 = scalar_select %p337, %s336, 31
        %s339 = smul.addr %s338, 8
        %s340 = scalar_lea.vmem %s0, %s339
        %s341 = smul.u32 8, %s20
        %s342 = smul.u32 8, %s20
        %p343 = scmp.lt.s32.totalorder %s342, 31
        %s344 = scalar_select %p343, %s342, 31
        %s345 = smul.addr %s344, 8
        %s346 = scalar_lea.vmem %s1, %s345
        %s347 = smul.u32 8, %s20
        %p348 = scmp.lt.s32.totalorder %s21, 1
        %s349 = scalar_select %p348, %s21, 1
        %s350 = smul.addr %s349, 4
        %s351 = scalar_lea.vmem %s2, %s350
        %s352 = smul.u32 16, %s21
        %p353 = scmp.lt.s32.totalorder %s352, 31
        %s354 = scalar_select %p353, %s352, 31
        %s355 = smul.addr %s354, 4
        %s356 = scalar_lea.vmem %s3, %s355
        %s357 = smul.u32 16, %s21
        %s358 = smul.u32 2, %s20
        %s359 = smul.u32 8, %s20
        %p360 = scmp.lt.s32.totalorder %s359, 31
        %s361 = scalar_select %p360, %s359, 31
        %s362 = smul.addr %s361, 8
        %s363 = scalar_lea.vmem %s5, %s362
        %s364 = smul.u32 8, %s20
        %p368 = scmp.eq.s32.totalorder %s21, 0
        // Predicated region
        $region79: #{tpu_custom_call.1} parent=73 // pred_check
          %p369 = pneg %p368
        $region80: #{tpu_custom_call.1} parent=73 // pred_check_branch
          %371 = sbr.rel (%p369) target = $region82
        $region81: #{tpu_custom_call.1} parent=73 // pred_region
          %vm372 = vcmask 31744
          %373 = vst.msk [vmem:[#allocation2] sm:$0xff] %vm372, -inf
          %374 = vst.msk [vmem:[#allocation2 + $0x8] sm:$0xff] %vm372, -inf
          %375 = vst.msk [vmem:[#allocation2 + $0x10] sm:$0xff] %vm372, -inf
          %376 = vst.msk [vmem:[#allocation2 + $0x18] sm:$0xff] %vm372, -inf
          %377 = vst.msk [vmem:[#allocation2 + $0x20] sm:$0xff] %vm372, -inf
          %378 = vst.msk [vmem:[#allocation2 + $0x28] sm:$0xff] %vm372, -inf
          %379 = vst.msk [vmem:[#allocation2 + $0x30] sm:$0xff] %vm372, -inf
          %380 = vst.msk [vmem:[#allocation2 + $0x38] sm:$0xff] %vm372, -inf
          %381 = vst.msk [vmem:[#allocation3] sm:$0xff] %vm372, 0.0
          %382 = vst.msk [vmem:[#allocation3 + $0x8] sm:$0xff] %vm372, 0.0
          %383 = vst.msk [vmem:[#allocation3 + $0x10] sm:$0xff] %vm372, 0.0
          %384 = vst.msk [vmem:[#allocation3 + $0x18] sm:$0xff] %vm372, 0.0
          %385 = vst.msk [vmem:[#allocation3 + $0x20] sm:$0xff] %vm372, 0.0
          %386 = vst.msk [vmem:[#allocation3 + $0x28] sm:$0xff] %vm372, 0.0
          %387 = vst.msk [vmem:[#allocation3 + $0x30] sm:$0xff] %vm372, 0.0
          %388 = vst.msk [vmem:[#allocation3 + $0x38] sm:$0xff] %vm372, 0.0
          %vm389 = vcmask 261120
          %390 = vst.msk [vmem:[#allocation4] sm:$0xff] %vm389, 0.0
          %391 = vst.msk [vmem:[#allocation4 + $0x8] sm:$0xff] %vm389, 0.0
          %392 = vst.msk [vmem:[#allocation4 + $0x10] sm:$0xff] %vm389, 0.0
          %393 = vst.msk [vmem:[#allocation4 + $0x18] sm:$0xff] %vm389, 0.0
          %394 = vst.msk [vmem:[#allocation4 + $0x20] sm:$0xff] %vm389, 0.0
          %395 = vst.msk [vmem:[#allocation4 + $0x28] sm:$0xff] %vm389, 0.0
          %396 = vst.msk [vmem:[#allocation4 + $0x30] sm:$0xff] %vm389, 0.0
          %397 = vst.msk [vmem:[#allocation4 + $0x38] sm:$0xff] %vm389, 0.0
        $region82: #{tpu_custom_call.1} parent=73 // pred_fallthru
          _
        %v398 = vld [vmem:[%s292] sm:$0xff]
        %v399 = vld [vmem:[%s292 + $0x8] sm:$0xff]
        %vm400 = vnez %v398
        %vm401 = vnez %v399
        %v402 = vld [vmem:[%s340] sm:$0xff]
        %v403 = vld [vmem:[%s340 + $0x8] sm:$0xff]
        %v404 = vld [vmem:[%s340 + $0x10] sm:$0xff]
        %v405 = vld [vmem:[%s340 + $0x18] sm:$0xff]
        %v406 = vld [vmem:[%s340 + $0x20] sm:$0xff]
        %v407 = vld [vmem:[%s340 + $0x28] sm:$0xff]
        %v408 = vld [vmem:[%s340 + $0x30] sm:$0xff]
        %v409 = vld [vmem:[%s340 + $0x38] sm:$0xff]
        %v410 = vld [vmem:[%s351] sm:$0xf]
        %v411 = vld [vmem:[%s356] sm:$0xf]
        %v412 = vld [vmem:[%s356 + $0x4] sm:$0xf]
        %v413 = vld [vmem:[%s356 + $0x8] sm:$0xf]
        %v414 = vld [vmem:[%s356 + $0xc] sm:$0xf]
        %v415 = vld [vmem:[%s356 + $0x10] sm:$0xf]
        %v416 = vld [vmem:[%s356 + $0x14] sm:$0xf]
        %v417 = vld [vmem:[%s356 + $0x18] sm:$0xf]
        %v418 = vld [vmem:[%s356 + $0x1c] sm:$0xf]
        %v419 = vld [vmem:[%s356 + $0x20] sm:$0xf]
        %v420 = vld [vmem:[%s356 + $0x24] sm:$0xf]
        %v421 = vld [vmem:[%s356 + $0x28] sm:$0xf]
        %v422 = vld [vmem:[%s356 + $0x2c] sm:$0xf]
        %v423 = vld [vmem:[%s356 + $0x30] sm:$0xf]
        %v424 = vld [vmem:[%s356 + $0x34] sm:$0xf]
        %v425 = vld [vmem:[%s356 + $0x38] sm:$0xf]
        %v426 = vld [vmem:[%s356 + $0x3c] sm:$0xf]
        %v427 = vld [vmem:[#allocation2] sm:$0xff]
        %v428 = vld [vmem:[#allocation2 + $0x8] sm:$0xff]
        %v429 = vld [vmem:[#allocation2 + $0x10] sm:$0xff]
        %v430 = vld [vmem:[#allocation2 + $0x18] sm:$0xff]
        %v431 = vld [vmem:[#allocation2 + $0x20] sm:$0xff]
        %v432 = vld [vmem:[#allocation2 + $0x28] sm:$0xff]
        %v433 = vld [vmem:[#allocation2 + $0x30] sm:$0xff]
        %v434 = vld [vmem:[#allocation2 + $0x38] sm:$0xff]
        %v435 = vld [vmem:[#allocation3] sm:$0xff]
        %v436 = vld [vmem:[#allocation3 + $0x8] sm:$0xff]
        %v437 = vld [vmem:[#allocation3 + $0x10] sm:$0xff]
        %v438 = vld [vmem:[#allocation3 + $0x18] sm:$0xff]
        %v439 = vld [vmem:[#allocation3 + $0x20] sm:$0xff]
        %v440 = vld [vmem:[#allocation3 + $0x28] sm:$0xff]
        %v441 = vld [vmem:[#allocation3 + $0x30] sm:$0xff]
        %v442 = vld [vmem:[#allocation3 + $0x38] sm:$0xff]
        %444 = vset.pattern.permute.xlu0 0
        %445 = vperm.xlu0 %444, %v402
        %v446 = vpop.permute.xlu0 %445
        %449 = vset.pattern.permute.xlu0 0
        %450 = vperm.xlu0 %449, %v403
        %v451 = vpop.permute.xlu0 %450
        %454 = vset.pattern.permute.xlu0 0
        %455 = vperm.xlu0 %454, %v404
        %v456 = vpop.permute.xlu0 %455
        %459 = vset.pattern.permute.xlu0 0
        %460 = vperm.xlu0 %459, %v405
        %v461 = vpop.permute.xlu0 %460
        %464 = vset.pattern.permute.xlu0 0
        %465 = vperm.xlu0 %464, %v406
        %v466 = vpop.permute.xlu0 %465
        %469 = vset.pattern.permute.xlu0 0
        %470 = vperm.xlu0 %469, %v407
        %v471 = vpop.permute.xlu0 %470
        %474 = vset.pattern.permute.xlu0 0
        %475 = vperm.xlu0 %474, %v408
        %v476 = vpop.permute.xlu0 %475
        %479 = vset.pattern.permute.xlu0 0
        %480 = vperm.xlu0 %479, %v409
        %v481 = vpop.permute.xlu0 %480
        %v483 = vlaneseq
        %v484 = vshrl.u32 %v483, 7
        %v485 = vsub.s32 0, %v484
        %v486 = vrot.slane %v410, %v485
        %v487 = vadd.f32 %v446, %v486
        %v488 = vadd.f32 %v451, %v486
        %v489 = vadd.f32 %v456, %v486
        %v490 = vadd.f32 %v461, %v486
        %v491 = vadd.f32 %v466, %v486
        %v492 = vadd.f32 %v471, %v486
        %v493 = vadd.f32 %v476, %v486
        %v494 = vadd.f32 %v481, %v486
        %v495 = vmul.f32 %v487, 0.2
        %v496 = vmul.f32 %v488, 0.2
        %v497 = vmul.f32 %v489, 0.2
        %v498 = vmul.f32 %v490, 0.2
        %v499 = vmul.f32 %v491, 0.2
        %v500 = vmul.f32 %v492, 0.2
        %v501 = vmul.f32 %v493, 0.2
        %v502 = vmul.f32 %v494, 0.2
        %v503 = vmax.f32 %v487, %v495
        %v504 = vmax.f32 %v488, %v496
        %v505 = vmax.f32 %v489, %v497
        %v506 = vmax.f32 %v490, %v498
        %v507 = vmax.f32 %v491, %v499
        %v508 = vmax.f32 %v492, %v500
        %v509 = vmax.f32 %v493, %v501
        %v510 = vmax.f32 %v494, %v502
        %v511 = vsel %vm400, 16843009, 0
        %v512 = vsel %vm401, 16843009, 0
        %v513 = vunpack.c.0.s8 %v511
        %v514 = vunpack.c.1.s8 %v511
        %v515 = vunpack.c.2.s8 %v511
        %v516 = vunpack.c.3.s8 %v511
        %v517 = vunpack.c.0.s8 %v512
        %v518 = vunpack.c.1.s8 %v512
        %v519 = vunpack.c.2.s8 %v512
        %v520 = vunpack.c.3.s8 %v512
        %v521 = vpack.c.b16 %v513, %v513
        %v522 = vpack.c.b8 %v521, %v521
        %v523 = vpack.c.b16 %v514, %v514
        %v524 = vpack.c.b8 %v523, %v523
        %v525 = vpack.c.b16 %v515, %v515
        %v526 = vpack.c.b8 %v525, %v525
        %v527 = vpack.c.b16 %v516, %v516
        %v528 = vpack.c.b8 %v527, %v527
        %v529 = vpack.c.b16 %v517, %v517
        %v530 = vpack.c.b8 %v529, %v529
        %v531 = vpack.c.b16 %v518, %v518
        %v532 = vpack.c.b8 %v531, %v531
        %v533 = vpack.c.b16 %v519, %v519
        %v534 = vpack.c.b8 %v533, %v533
        %v535 = vpack.c.b16 %v520, %v520
        %v536 = vpack.c.b8 %v535, %v535
        %vm537 = vnez %v522
        %vm538 = vnez %v524
        %vm539 = vnez %v526
        %vm540 = vnez %v528
        %vm541 = vnez %v530
        %vm542 = vnez %v532
        %vm543 = vnez %v534
        %vm544 = vnez %v536
        %v545 = vsel %vm537, 16843009, 0
        %v546 = vsel %vm538, 16843009, 0
        %v547 = vsel %vm539, 16843009, 0
        %v548 = vsel %vm540, 16843009, 0
        %v549 = vsel %vm541, 16843009, 0
        %v550 = vsel %vm542, 16843009, 0
        %v551 = vsel %vm543, 16843009, 0
        %v552 = vsel %vm544, 16843009, 0
        %v553 = vunpack.c.0.s8 %v545
        %v554 = vunpack.c.0.s8 %v546
        %v555 = vunpack.c.0.s8 %v547
        %v556 = vunpack.c.0.s8 %v548
        %v557 = vunpack.c.0.s8 %v549
        %v558 = vunpack.c.0.s8 %v550
        %v559 = vunpack.c.0.s8 %v551
        %v560 = vunpack.c.0.s8 %v552
        %vm561 = vcmp.ne.s32.totalorder %v553, 0
        %vm562 = vcmp.ne.s32.totalorder %v554, 0
        %vm563 = vcmp.ne.s32.totalorder %v555, 0
        %vm564 = vcmp.ne.s32.totalorder %v556, 0
        %vm565 = vcmp.ne.s32.totalorder %v557, 0
        %vm566 = vcmp.ne.s32.totalorder %v558, 0
        %vm567 = vcmp.ne.s32.totalorder %v559, 0
        %vm568 = vcmp.ne.s32.totalorder %v560, 0
        %v569 = vsel %vm561, %v503, -1e+30
        %v570 = vsel %vm562, %v504, -1e+30
        %v571 = vsel %vm563, %v505, -1e+30
        %v572 = vsel %vm564, %v506, -1e+30
        %v573 = vsel %vm565, %v507, -1e+30
        %v574 = vsel %vm566, %v508, -1e+30
        %v575 = vsel %vm567, %v509, -1e+30
        %v576 = vsel %vm568, %v510, -1e+30
        %577 = vmax.xlane.f32.xlu0 %v569
        %v578 = vpop.xlane.xlu0 %577
        %579 = vmax.xlane.f32.xlu0 %v570
        %v580 = vpop.xlane.xlu0 %579
        %581 = vmax.xlane.f32.xlu0 %v571
        %v582 = vpop.xlane.xlu0 %581
        %583 = vmax.xlane.f32.xlu0 %v572
        %v584 = vpop.xlane.xlu0 %583
        %585 = vmax.xlane.f32.xlu0 %v573
        %v586 = vpop.xlane.xlu0 %585
        %587 = vmax.xlane.f32.xlu0 %v574
        %v588 = vpop.xlane.xlu0 %587
        %589 = vmax.xlane.f32.xlu0 %v575
        %v590 = vpop.xlane.xlu0 %589
        %591 = vmax.xlane.f32.xlu0 %v576
        %v592 = vpop.xlane.xlu0 %591
        %v593 = vmax.f32 %v427, %v578
        %v594 = vmax.f32 %v428, %v580
        %v595 = vmax.f32 %v429, %v582
        %v596 = vmax.f32 %v430, %v584
        %v597 = vmax.f32 %v431, %v586
        %v598 = vmax.f32 %v432, %v588
        %v599 = vmax.f32 %v433, %v590
        %v600 = vmax.f32 %v434, %v592
        %v601 = vsub.f32 %v427, %v593
        %v602 = vsub.f32 %v428, %v594
        %v603 = vsub.f32 %v429, %v595
        %v604 = vsub.f32 %v430, %v596
        %v605 = vsub.f32 %v431, %v597
        %v606 = vsub.f32 %v432, %v598
        %v607 = vsub.f32 %v433, %v599
        %v608 = vsub.f32 %v434, %v600
        %v609 = vmul.f32 %v601, 1.442695
        %v610 = vpow.pop %v609
        %v611 = vmul.f32 %v602, 1.442695
        %v612 = vpow.pop %v611
        %v613 = vmul.f32 %v603, 1.442695
        %v614 = vpow.pop %v613
        %v615 = vmul.f32 %v604, 1.442695
        %v616 = vpow.pop %v615
        %v617 = vmul.f32 %v605, 1.442695
        %v618 = vpow.pop %v617
        %v619 = vmul.f32 %v606, 1.442695
        %v620 = vpow.pop %v619
        %v621 = vmul.f32 %v607, 1.442695
        %v622 = vpow.pop %v621
        %v623 = vmul.f32 %v608, 1.442695
        %v624 = vpow.pop %v623
        %626 = vset.pattern.permute.xlu0 0
        %627 = vperm.xlu0 %626, %v593
        %v628 = vpop.permute.xlu0 %627
        %631 = vset.pattern.permute.xlu0 0
        %632 = vperm.xlu0 %631, %v594
        %v633 = vpop.permute.xlu0 %632
        %636 = vset.pattern.permute.xlu0 0
        %637 = vperm.xlu0 %636, %v595
        %v638 = vpop.permute.xlu0 %637
        %641 = vset.pattern.permute.xlu0 0
        %642 = vperm.xlu0 %641, %v596
        %v643 = vpop.permute.xlu0 %642
        %646 = vset.pattern.permute.xlu0 0
        %647 = vperm.xlu0 %646, %v597
        %v648 = vpop.permute.xlu0 %647
        %651 = vset.pattern.permute.xlu0 0
        %652 = vperm.xlu0 %651, %v598
        %v653 = vpop.permute.xlu0 %652
        %656 = vset.pattern.permute.xlu0 0
        %657 = vperm.xlu0 %656, %v599
        %v658 = vpop.permute.xlu0 %657
        %661 = vset.pattern.permute.xlu0 0
        %662 = vperm.xlu0 %661, %v600
        %v663 = vpop.permute.xlu0 %662
        %v665 = vsub.f32 %v569, %v628
        %v666 = vsub.f32 %v570, %v633
        %v667 = vsub.f32 %v571, %v638
        %v668 = vsub.f32 %v572, %v643
        %v669 = vsub.f32 %v573, %v648
        %v670 = vsub.f32 %v574, %v653
        %v671 = vsub.f32 %v575, %v658
        %v672 = vsub.f32 %v576, %v663
        %v673 = vmul.f32 %v665, 1.442695
        %v674 = vpow.pop %v673
        %v675 = vmul.f32 %v666, 1.442695
        %v676 = vpow.pop %v675
        %v677 = vmul.f32 %v667, 1.442695
        %v678 = vpow.pop %v677
        %v679 = vmul.f32 %v668, 1.442695
        %v680 = vpow.pop %v679
        %v681 = vmul.f32 %v669, 1.442695
        %v682 = vpow.pop %v681
        %v683 = vmul.f32 %v670, 1.442695
        %v684 = vpow.pop %v683
        %v685 = vmul.f32 %v671, 1.442695
        %v686 = vpow.pop %v685
        %v687 = vmul.f32 %v672, 1.442695
        %v688 = vpow.pop %v687
        %v689 = vmul.f32 %v610, %v435
        %v690 = vmul.f32 %v612, %v436
        %v691 = vmul.f32 %v614, %v437
        %v692 = vmul.f32 %v616, %v438
        %v693 = vmul.f32 %v618, %v439
        %v694 = vmul.f32 %v620, %v440
        %v695 = vmul.f32 %v622, %v441
        %v696 = vmul.f32 %v624, %v442
        %697 = vadd.xlane.f32.xlu0 %v674
        %v698 = vpop.xlane.xlu0 %697
        %699 = vadd.xlane.f32.xlu0 %v676
        %v700 = vpop.xlane.xlu0 %699
        %701 = vadd.xlane.f32.xlu0 %v678
        %v702 = vpop.xlane.xlu0 %701
        %703 = vadd.xlane.f32.xlu0 %v680
        %v704 = vpop.xlane.xlu0 %703
        %705 = vadd.xlane.f32.xlu0 %v682
        %v706 = vpop.xlane.xlu0 %705
        %707 = vadd.xlane.f32.xlu0 %v684
        %v708 = vpop.xlane.xlu0 %707
        %709 = vadd.xlane.f32.xlu0 %v686
        %v710 = vpop.xlane.xlu0 %709
        %711 = vadd.xlane.f32.xlu0 %v688
        %v712 = vpop.xlane.xlu0 %711
        %v713 = vadd.f32 %v689, %v698
        %v714 = vadd.f32 %v690, %v700
        %v715 = vadd.f32 %v691, %v702
        %v716 = vadd.f32 %v692, %v704
        %v717 = vadd.f32 %v693, %v706
        %v718 = vadd.f32 %v694, %v708
        %v719 = vadd.f32 %v695, %v710
        %v720 = vadd.f32 %v696, %v712
        %v721 = vpack.c.bf16 %v676, %v674
        %v722 = vpack.c.bf16 %v680, %v678
        %v723 = vpack.c.bf16 %v684, %v682
        %v724 = vpack.c.bf16 %v688, %v686
        %v741 = vunpack.c.l.b16 %v411
        %v742 = vunpack.c.l.b16 %v412
        %v743 = vunpack.c.l.b16 %v413
        %v744 = vunpack.c.l.b16 %v414
        %v745 = vunpack.c.l.b16 %v415
        %v746 = vunpack.c.l.b16 %v416
        %v747 = vunpack.c.l.b16 %v417
        %v748 = vunpack.c.l.b16 %v418
        %v749 = vunpack.c.l.b16 %v419
        %v750 = vunpack.c.l.b16 %v420
        %v751 = vunpack.c.l.b16 %v421
        %v752 = vunpack.c.l.b16 %v422
        %v753 = vunpack.c.l.b16 %v423
        %v754 = vunpack.c.l.b16 %v424
        %v755 = vunpack.c.l.b16 %v425
        %v756 = vunpack.c.l.b16 %v426
        %v757 = vpack.c.b16 %v742, %v741
        %v758 = vpack.c.b16 %v744, %v743
        %v759 = vpack.c.b16 %v746, %v745
        %v760 = vpack.c.b16 %v748, %v747
        %v761 = vpack.c.b16 %v750, %v749
        %v762 = vpack.c.b16 %v752, %v751
        %v763 = vpack.c.b16 %v754, %v753
        %v764 = vpack.c.b16 %v756, %v755
        %773 = vmatprep.subr.bf16.mxu0 0
        %774 = vmatpush1.bf16.msra.mxu0 %v757
        %775 = vmatprep.subr.bf16.mxu0 0
        %776 = vmatpush1.bf16.msra.mxu0 %v758
        %777 = vmatprep.subr.bf16.mxu0 0
        %778 = vmatpush1.bf16.msra.mxu0 %v759
        %779 = vmatprep.subr.bf16.mxu0 0
        %780 = vmatpush1.bf16.msra.mxu0 %v760
        %781 = vmatprep.subr.bf16.mxu0 0
        %782 = vmatpush1.bf16.msra.mxu0 %v761
        %783 = vmatprep.subr.bf16.mxu0 0
        %784 = vmatpush1.bf16.msra.mxu0 %v762
        %785 = vmatprep.subr.bf16.mxu0 0
        %786 = vmatpush1.bf16.msra.mxu0 %v763
        %787 = vmatprep.subr.bf16.mxu0 0
        %788 = vmatpush1.bf16.msra.mxu0 %v764
        %789 = vmatprep.subr.bf16.mxu0 0
        %790 = vmatpush1.bf16.msra.mxu0 0
        %791 = vmatprep.subr.bf16.mxu0 0
        %792 = vmatpush1.bf16.msra.mxu0 0
        %793 = vmatprep.subr.bf16.mxu0 0
        %794 = vmatpush1.bf16.msra.mxu0 0
        %795 = vmatprep.subr.bf16.mxu0 0
        %796 = vmatpush1.bf16.msra.mxu0 0
        %797 = vmatprep.subr.bf16.mxu0 0
        %798 = vmatpush1.bf16.msra.mxu0 0
        %799 = vmatprep.subr.bf16.mxu0 0
        %800 = vmatpush1.bf16.msra.mxu0 0
        %801 = vmatprep.subr.bf16.mxu0 0
        %802 = vmatpush1.bf16.msra.mxu0 0
        %803 = vmatprep.subr.bf16.mxu0 0
        %804 = vmatpush1.bf16.msra.mxu0 0
        %805 = vmatprep.mubr.bf16.mxu0 0
        %806 = vmatmul.mubr.bf16.gmra.mrb[0].mxu0 %v721
        %v807 = vpop.f32.mrb[0].mxu0
        %v808 = vadd.f32 0.0, %v807
        %v809 = vpop.f32.mrb[0].mxu0
        %v810 = vpop.f32.mrb[0].mxu0
        %v811 = vadd.f32 0.0, %v810
        %v812 = vpop.f32.mrb[0].mxu0
        %813 = vmatprep.mubr.bf16.mxu0 0
        %814 = vmatmul.mubr.bf16.gmra.mrb[0].mxu0 %v722
        %v815 = vpop.f32.mrb[0].mxu0
        %v816 = vadd.f32 0.0, %v815
        %v817 = vpop.f32.mrb[0].mxu0
        %v818 = vpop.f32.mrb[0].mxu0
        %v819 = vadd.f32 0.0, %v818
        %v820 = vpop.f32.mrb[0].mxu0
        %821 = vmatprep.mubr.bf16.mxu0 0
        %822 = vmatmul.mubr.bf16.gmra.mrb[0].mxu0 %v723
        %v823 = vpop.f32.mrb[0].mxu0
        %v824 = vadd.f32 0.0, %v823
        %v825 = vpop.f32.mrb[0].mxu0
        %v826 = vpop.f32.mrb[0].mxu0
        %v827 = vadd.f32 0.0, %v826
        %v828 = vpop.f32.mrb[0].mxu0
        %829 = vmatprep.mubr.bf16.mxu0 0
        %830 = vmatmul.mubr.bf16.gmra.mrb[0].mxu0 %v724
        %v831 = vpop.f32.mrb[0].mxu0
        %v832 = vadd.f32 0.0, %v831
        %v833 = vpop.f32.mrb[0].mxu0
        %v834 = vpop.f32.mrb[0].mxu0
        %v835 = vadd.f32 0.0, %v834
        %v836 = vpop.f32.mrb[0].mxu0
        %837 = vdwg.mxu0
        %v838 = vld [vmem:[#allocation4] sm:$0xff]
        %v839 = vld [vmem:[#allocation4 + $0x8] sm:$0xff]
        %v840 = vld [vmem:[#allocation4 + $0x10] sm:$0xff]
        %v841 = vld [vmem:[#allocation4 + $0x18] sm:$0xff]
        %v842 = vld [vmem:[#allocation4 + $0x20] sm:$0xff]
        %v843 = vld [vmem:[#allocation4 + $0x28] sm:$0xff]
        %v844 = vld [vmem:[#allocation4 + $0x30] sm:$0xff]
        %v845 = vld [vmem:[#allocation4 + $0x38] sm:$0xff]
        %847 = vset.pattern.permute.xlu0 0
        %848 = vperm.xlu0 %847, %v610
        %v849 = vpop.permute.xlu0 %848
        %852 = vset.pattern.permute.xlu0 0
        %853 = vperm.xlu0 %852, %v612
        %v854 = vpop.permute.xlu0 %853
        %857 = vset.pattern.permute.xlu0 0
        %858 = vperm.xlu0 %857, %v614
        %v859 = vpop.permute.xlu0 %858
        %862 = vset.pattern.permute.xlu0 0
        %863 = vperm.xlu0 %862, %v616
        %v864 = vpop.permute.xlu0 %863
        %867 = vset.pattern.permute.xlu0 0
        %868 = vperm.xlu0 %867, %v618
        %v869 = vpop.permute.xlu0 %868
        %872 = vset.pattern.permute.xlu0 0
        %873 = vperm.xlu0 %872, %v620
        %v874 = vpop.permute.xlu0 %873
        %877 = vset.pattern.permute.xlu0 0
        %878 = vperm.xlu0 %877, %v622
        %v879 = vpop.permute.xlu0 %878
        %882 = vset.pattern.permute.xlu0 0
        %883 = vperm.xlu0 %882, %v624
        %v884 = vpop.permute.xlu0 %883
        %v886 = vmul.f32 %v849, %v838
        %v887 = vmul.f32 %v854, %v839
        %v888 = vmul.f32 %v859, %v840
        %v889 = vmul.f32 %v864, %v841
        %v890 = vmul.f32 %v869, %v842
        %v891 = vmul.f32 %v874, %v843
        %v892 = vmul.f32 %v879, %v844
        %v893 = vmul.f32 %v884, %v845
        %v894 = vadd.f32 %v886, %v808
        %v895 = vadd.f32 %v887, %v811
        %v896 = vadd.f32 %v888, %v816
        %v897 = vadd.f32 %v889, %v819
        %v898 = vadd.f32 %v890, %v824
        %v899 = vadd.f32 %v891, %v827
        %v900 = vadd.f32 %v892, %v832
        %v901 = vadd.f32 %v893, %v835
        %902 = vset.pattern.permute.xlu0 1
        %903 = vperm.xlu0 %902, %v402
        %v904 = vpop.permute.xlu0 %903
        %906 = vset.pattern.permute.xlu0 1
        %907 = vperm.xlu0 %906, %v403
        %v908 = vpop.permute.xlu0 %907
        %910 = vset.pattern.permute.xlu0 1
        %911 = vperm.xlu0 %910, %v404
        %v912 = vpop.permute.xlu0 %911
        %914 = vset.pattern.permute.xlu0 1
        %915 = vperm.xlu0 %914, %v405
        %v916 = vpop.permute.xlu0 %915
        %918 = vset.pattern.permute.xlu0 1
        %919 = vperm.xlu0 %918, %v406
        %v920 = vpop.permute.xlu0 %919
        %922 = vset.pattern.permute.xlu0 1
        %923 = vperm.xlu0 %922, %v407
        %v924 = vpop.permute.xlu0 %923
        %926 = vset.pattern.permute.xlu0 1
        %927 = vperm.xlu0 %926, %v408
        %v928 = vpop.permute.xlu0 %927
        %930 = vset.pattern.permute.xlu0 1
        %931 = vperm.xlu0 %930, %v409
        %v932 = vpop.permute.xlu0 %931
        %v934 = vlaneseq
        %v935 = vshrl.u32 %v934, 7
        %v936 = vsub.s32 1, %v935
        %v937 = vrot.slane %v410, %v936
        %v938 = vadd.f32 %v904, %v937
        %v939 = vadd.f32 %v908, %v937
        %v940 = vadd.f32 %v912, %v937
        %v941 = vadd.f32 %v916, %v937
        %v942 = vadd.f32 %v920, %v937
        %v943 = vadd.f32 %v924, %v937
        %v944 = vadd.f32 %v928, %v937
        %v945 = vadd.f32 %v932, %v937
        %v946 = vmul.f32 %v938, 0.2
        %v947 = vmul.f32 %v939, 0.2
        %v948 = vmul.f32 %v940, 0.2
        %v949 = vmul.f32 %v941, 0.2
        %v950 = vmul.f32 %v942, 0.2
        %v951 = vmul.f32 %v943, 0.2
        %v952 = vmul.f32 %v944, 0.2
        %v953 = vmul.f32 %v945, 0.2
        %v954 = vmax.f32 %v938, %v946
        %v955 = vmax.f32 %v939, %v947
        %v956 = vmax.f32 %v940, %v948
        %v957 = vmax.f32 %v941, %v949
        %v958 = vmax.f32 %v942, %v950
        %v959 = vmax.f32 %v943, %v951
        %v960 = vmax.f32 %v944, %v952
        %v961 = vmax.f32 %v945, %v953
        %v962 = vsel %vm561, %v954, -1e+30
        %v963 = vsel %vm562, %v955, -1e+30
        %v964 = vsel %vm563, %v956, -1e+30
        %v965 = vsel %vm564, %v957, -1e+30
        %v966 = vsel %vm565, %v958, -1e+30
        %v967 = vsel %vm566, %v959, -1e+30
        %v968 = vsel %vm567, %v960, -1e+30
        %v969 = vsel %vm568, %v961, -1e+30
        %970 = vmax.xlane.f32.xlu0 %v962
        %v971 = vpop.xlane.xlu0 %970
        %972 = vmax.xlane.f32.xlu0 %v963
        %v973 = vpop.xlane.xlu0 %972
        %974 = vmax.xlane.f32.xlu0 %v964
        %v975 = vpop.xlane.xlu0 %974
        %976 = vmax.xlane.f32.xlu0 %v965
        %v977 = vpop.xlane.xlu0 %976
        %978 = vmax.xlane.f32.xlu0 %v966
        %v979 = vpop.xlane.xlu0 %978
        %980 = vmax.xlane.f32.xlu0 %v967
        %v981 = vpop.xlane.xlu0 %980
        %982 = vmax.xlane.f32.xlu0 %v968
        %v983 = vpop.xlane.xlu0 %982
        %984 = vmax.xlane.f32.xlu0 %v969
        %v985 = vpop.xlane.xlu0 %984
        %v986 = vmax.f32 %v427, %v971
        %v987 = vmax.f32 %v428, %v973
        %v988 = vmax.f32 %v429, %v975
        %v989 = vmax.f32 %v430, %v977
        %v990 = vmax.f32 %v431, %v979
        %v991 = vmax.f32 %v432, %v981
        %v992 = vmax.f32 %v433, %v983
        %v993 = vmax.f32 %v434, %v985
        %v994 = vsub.f32 %v427, %v986
        %v995 = vsub.f32 %v428, %v987
        %v996 = vsub.f32 %v429, %v988
        %v997 = vsub.f32 %v430, %v989
        %v998 = vsub.f32 %v431, %v990
        %v999 = vsub.f32 %v432, %v991
        %v1000 = vsub.f32 %v433, %v992
        %v1001 = vsub.f32 %v434, %v993
        %v1002 = vmul.f32 %v994, 1.442695
        %v1003 = vpow.pop %v1002
        %v1004 = vmul.f32 %v995, 1.442695
        %v1005 = vpow.pop %v1004
        %v1006 = vmul.f32 %v996, 1.442695
        %v1007 = vpow.pop %v1006
        %v1008 = vmul.f32 %v997, 1.442695
        %v1009 = vpow.pop %v1008
        %v1010 = vmul.f32 %v998, 1.442695
        %v1011 = vpow.pop %v1010
        %v1012 = vmul.f32 %v999, 1.442695
        %v1013 = vpow.pop %v1012
        %v1014 = vmul.f32 %v1000, 1.442695
        %v1015 = vpow.pop %v1014
        %v1016 = vmul.f32 %v1001, 1.442695
        %v1017 = vpow.pop %v1016
        %1019 = vset.pattern.permute.xlu0 1
        %1020 = vperm.xlu0 %1019, %v986
        %v1021 = vpop.permute.xlu0 %1020
        %1024 = vset.pattern.permute.xlu0 1
        %1025 = vperm.xlu0 %1024, %v987
        %v1026 = vpop.permute.xlu0 %1025
        %1029 = vset.pattern.permute.xlu0 1
        %1030 = vperm.xlu0 %1029, %v988
        %v1031 = vpop.permute.xlu0 %1030
        %1034 = vset.pattern.permute.xlu0 1
        %1035 = vperm.xlu0 %1034, %v989
        %v1036 = vpop.permute.xlu0 %1035
        %1039 = vset.pattern.permute.xlu0 1
        %1040 = vperm.xlu0 %1039, %v990
        %v1041 = vpop.permute.xlu0 %1040
        %1044 = vset.pattern.permute.xlu0 1
        %1045 = vperm.xlu0 %1044, %v991
        %v1046 = vpop.permute.xlu0 %1045
        %1049 = vset.pattern.permute.xlu0 1
        %1050 = vperm.xlu0 %1049, %v992
        %v1051 = vpop.permute.xlu0 %1050
        %1054 = vset.pattern.permute.xlu0 1
        %1055 = vperm.xlu0 %1054, %v993
        %v1056 = vpop.permute.xlu0 %1055
        %v1058 = vsub.f32 %v962, %v1021
        %v1059 = vsub.f32 %v963, %v1026
        %v1060 = vsub.f32 %v964, %v1031
        %v1061 = vsub.f32 %v965, %v1036
        %v1062 = vsub.f32 %v966, %v1041
        %v1063 = vsub.f32 %v967, %v1046
        %v1064 = vsub.f32 %v968, %v1051
        %v1065 = vsub.f32 %v969, %v1056
        %v1066 = vmul.f32 %v1058, 1.442695
        %v1067 = vpow.pop %v1066
        %v1068 = vmul.f32 %v1059, 1.442695
        %v1069 = vpow.pop %v1068
        %v1070 = vmul.f32 %v1060, 1.442695
        %v1071 = vpow.pop %v1070
        %v1072 = vmul.f32 %v1061, 1.442695
        %v1073 = vpow.pop %v1072
        %v1074 = vmul.f32 %v1062, 1.442695
        %v1075 = vpow.pop %v1074
        %v1076 = vmul.f32 %v1063, 1.442695
        %v1077 = vpow.pop %v1076
        %v1078 = vmul.f32 %v1064, 1.442695
        %v1079 = vpow.pop %v1078
        %v1080 = vmul.f32 %v1065, 1.442695
        %v1081 = vpow.pop %v1080
        %v1082 = vmul.f32 %v1003, %v435
        %v1083 = vmul.f32 %v1005, %v436
        %v1084 = vmul.f32 %v1007, %v437
        %v1085 = vmul.f32 %v1009, %v438
        %v1086 = vmul.f32 %v1011, %v439
        %v1087 = vmul.f32 %v1013, %v440
        %v1088 = vmul.f32 %v1015, %v441
        %v1089 = vmul.f32 %v1017, %v442
        %1090 = vadd.xlane.f32.xlu0 %v1067
        %v1091 = vpop.xlane.xlu0 %1090
        %1092 = vadd.xlane.f32.xlu0 %v1069
        %v1093 = vpop.xlane.xlu0 %1092
        %1094 = vadd.xlane.f32.xlu0 %v1071
        %v1095 = vpop.xlane.xlu0 %1094
        %1096 = vadd.xlane.f32.xlu0 %v1073
        %v1097 = vpop.xlane.xlu0 %1096
        %1098 = vadd.xlane.f32.xlu0 %v1075
        %v1099 = vpop.xlane.xlu0 %1098
        %1100 = vadd.xlane.f32.xlu0 %v1077
        %v1101 = vpop.xlane.xlu0 %1100
        %1102 = vadd.xlane.f32.xlu0 %v1079
        %v1103 = vpop.xlane.xlu0 %1102
        %1104 = vadd.xlane.f32.xlu0 %v1081
        %v1105 = vpop.xlane.xlu0 %1104
        %v1106 = vadd.f32 %v1082, %v1091
        %v1107 = vadd.f32 %v1083, %v1093
        %v1108 = vadd.f32 %v1084, %v1095
        %v1109 = vadd.f32 %v1085, %v1097
        %v1110 = vadd.f32 %v1086, %v1099
        %v1111 = vadd.f32 %v1087, %v1101
        %v1112 = vadd.f32 %v1088, %v1103
        %v1113 = vadd.f32 %v1089, %v1105
        %v1114 = vpack.c.bf16 %v1069, %v1067
        %v1115 = vpack.c.bf16 %v1073, %v1071
        %v1116 = vpack.c.bf16 %v1077, %v1075
        %v1117 = vpack.c.bf16 %v1081, %v1079
        %1118 = vrot.lane.b32.xlu0 %v757, 120
        %v1119 = vpop.permute.xlu0 %1118
        %1120 = vrot.lane.b32.xlu0 %v758, 120
        %v1121 = vpop.permute.xlu0 %1120
        %1122 = vrot.lane.b32.xlu0 %v759, 120
        %v1123 = vpop.permute.xlu0 %1122
        %1124 = vrot.lane.b32.xlu0 %v760, 120
        %v1125 = vpop.permute.xlu0 %1124
        %1126 = vrot.lane.b32.xlu0 %v761, 120
        %v1127 = vpop.permute.xlu0 %1126
        %1128 = vrot.lane.b32.xlu0 %v762, 120
        %v1129 = vpop.permute.xlu0 %1128
        %1130 = vrot.lane.b32.xlu0 %v763, 120
        %v1131 = vpop.permute.xlu0 %1130
        %1132 = vrot.lane.b32.xlu0 %v764, 120
        %v1133 = vpop.permute.xlu0 %1132
        %1142 = vmatprep.subr.bf16.mxu0 0
        %1143 = vmatpush1.bf16.msra.mxu0 %v1119
        %1144 = vmatprep.subr.bf16.mxu0 0
        %1145 = vmatpush1.bf16.msra.mxu0 %v1121
        %1146 = vmatprep.subr.bf16.mxu0 0
        %1147 = vmatpush1.bf16.msra.mxu0 %v1123
        %1148 = vmatprep.subr.bf16.mxu0 0
        %1149 = vmatpush1.bf16.msra.mxu0 %v1125
        %1150 = vmatprep.subr.bf16.mxu0 0
        %1151 = vmatpush1.bf16.msra.mxu0 %v1127
        %1152 = vmatprep.subr.bf16.mxu0 0
        %1153 = vmatpush1.bf16.msra.mxu0 %v1129
        %1154 = vmatprep.subr.bf16.mxu0 0
        %1155 = vmatpush1.bf16.msra.mxu0 %v1131
        %1156 = vmatprep.subr.bf16.mxu0 0
        %1157 = vmatpush1.bf16.msra.mxu0 %v1133
        %1158 = vmatprep.subr.bf16.mxu0 0
        %1159 = vmatpush1.bf16.msra.mxu0 0
        %1160 = vmatprep.subr.bf16.mxu0 0
        %1161 = vmatpush1.bf16.msra.mxu0 0
        %1162 = vmatprep.subr.bf16.mxu0 0
        %1163 = vmatpush1.bf16.msra.mxu0 0
        %1164 = vmatprep.subr.bf16.mxu0 0
        %1165 = vmatpush1.bf16.msra.mxu0 0
        %1166 = vmatprep.subr.bf16.mxu0 0
        %1167 = vmatpush1.bf16.msra.mxu0 0
        %1168 = vmatprep.subr.bf16.mxu0 0
        %1169 = vmatpush1.bf16.msra.mxu0 0
        %1170 = vmatprep.subr.bf16.mxu0 0
        %1171 = vmatpush1.bf16.msra.mxu0 0
        %1172 = vmatprep.subr.bf16.mxu0 0
        %1173 = vmatpush1.bf16.msra.mxu0 0
        %1174 = vmatprep.mubr.bf16.mxu0 0
        %1175 = vmatmul.mubr.bf16.gmra.mrb[0].mxu0 %v1114
        %v1176 = vpop.f32.mrb[0].mxu0
        %v1177 = vadd.f32 0.0, %v1176
        %v1178 = vpop.f32.mrb[0].mxu0
        %v1179 = vpop.f32.mrb[0].mxu0
        %v1180 = vadd.f32 0.0, %v1179
        %v1181 = vpop.f32.mrb[0].mxu0
        %1182 = vmatprep.mubr.bf16.mxu0 0
        %1183 = vmatmul.mubr.bf16.gmra.mrb[0].mxu0 %v1115
        %v1184 = vpop.f32.mrb[0].mxu0
        %v1185 = vadd.f32 0.0, %v1184
        %v1186 = vpop.f32.mrb[0].mxu0
        %v1187 = vpop.f32.mrb[0].mxu0
        %v1188 = vadd.f32 0.0, %v1187
        %v1189 = vpop.f32.mrb[0].mxu0
        %1190 = vmatprep.mubr.bf16.mxu0 0
        %1191 = vmatmul.mubr.bf16.gmra.mrb[0].mxu0 %v1116
        %v1192 = vpop.f32.mrb[0].mxu0
        %v1193 = vadd.f32 0.0, %v1192
        %v1194 = vpop.f32.mrb[0].mxu0
        %v1195 = vpop.f32.mrb[0].mxu0
        %v1196 = vadd.f32 0.0, %v1195
        %v1197 = vpop.f32.mrb[0].mxu0
        %1198 = vmatprep.mubr.bf16.mxu0 0
        %1199 = vmatmul.mubr.bf16.gmra.mrb[0].mxu0 %v1117
        %v1200 = vpop.f32.mrb[0].mxu0
        %v1201 = vadd.f32 0.0, %v1200
        %v1202 = vpop.f32.mrb[0].mxu0
        %v1203 = vpop.f32.mrb[0].mxu0
        %v1204 = vadd.f32 0.0, %v1203
        %v1205 = vpop.f32.mrb[0].mxu0
        %1206 = vdwg.mxu0
        %1208 = vset.pattern.permute.xlu0 1
        %1209 = vperm.xlu0 %1208, %v1003
        %v1210 = vpop.permute.xlu0 %1209
        %1213 = vset.pattern.permute.xlu0 1
        %1214 = vperm.xlu0 %1213, %v1005
        %v1215 = vpop.permute.xlu0 %1214
        %1218 = vset.pattern.permute.xlu0 1
        %1219 = vperm.xlu0 %1218, %v1007
        %v1220 = vpop.permute.xlu0 %1219
        %1223 = vset.pattern.permute.xlu0 1
        %1224 = vperm.xlu0 %1223, %v1009
        %v1225 = vpop.permute.xlu0 %1224
        %1228 = vset.pattern.permute.xlu0 1
        %1229 = vperm.xlu0 %1228, %v1011
        %v1230 = vpop.permute.xlu0 %1229
        %1233 = vset.pattern.permute.xlu0 1
        %1234 = vperm.xlu0 %1233, %v1013
        %v1235 = vpop.permute.xlu0 %1234
        %1238 = vset.pattern.permute.xlu0 1
        %1239 = vperm.xlu0 %1238, %v1015
        %v1240 = vpop.permute.xlu0 %1239
        %1243 = vset.pattern.permute.xlu0 1
        %1244 = vperm.xlu0 %1243, %v1017
        %v1245 = vpop.permute.xlu0 %1244
        %v1247 = vmul.f32 %v1210, %v838
        %v1248 = vmul.f32 %v1215, %v839
        %v1249 = vmul.f32 %v1220, %v840
        %v1250 = vmul.f32 %v1225, %v841
        %v1251 = vmul.f32 %v1230, %v842
        %v1252 = vmul.f32 %v1235, %v843
        %v1253 = vmul.f32 %v1240, %v844
        %v1254 = vmul.f32 %v1245, %v845
        %1263 = vrot.lane.b32.xlu0 %v1177, 8
        %v1264 = vpop.permute.xlu0 %1263
        %1265 = vrot.lane.b32.xlu0 %v1180, 8
        %v1266 = vpop.permute.xlu0 %1265
        %1267 = vrot.lane.b32.xlu0 %v1185, 8
        %v1268 = vpop.permute.xlu0 %1267
        %1269 = vrot.lane.b32.xlu0 %v1188, 8
        %v1270 = vpop.permute.xlu0 %1269
        %1271 = vrot.lane.b32.xlu0 %v1193, 8
        %v1272 = vpop.permute.xlu0 %1271
        %1273 = vrot.lane.b32.xlu0 %v1196, 8
        %v1274 = vpop.permute.xlu0 %1273
        %1275 = vrot.lane.b32.xlu0 %v1201, 8
        %v1276 = vpop.permute.xlu0 %1275
        %1277 = vrot.lane.b32.xlu0 %v1204, 8
        %v1278 = vpop.permute.xlu0 %1277
        %v1287 = vadd.f32 %v1247, %v1264
        %v1288 = vadd.f32 %v1248, %v1266
        %v1289 = vadd.f32 %v1249, %v1268
        %v1290 = vadd.f32 %v1250, %v1270
        %v1291 = vadd.f32 %v1251, %v1272
        %v1292 = vadd.f32 %v1252, %v1274
        %v1293 = vadd.f32 %v1253, %v1276
        %v1294 = vadd.f32 %v1254, %v1278
        %1295 = vset.pattern.permute.xlu0 2
        %1296 = vperm.xlu0 %1295, %v402
        %v1297 = vpop.permute.xlu0 %1296
        %1299 = vset.pattern.permute.xlu0 2
        %1300 = vperm.xlu0 %1299, %v403
        %v1301 = vpop.permute.xlu0 %1300
        %1303 = vset.pattern.permute.xlu0 2
        %1304 = vperm.xlu0 %1303, %v404
        %v1305 = vpop.permute.xlu0 %1304
        %1307 = vset.pattern.permute.xlu0 2
        %1308 = vperm.xlu0 %1307, %v405
        %v1309 = vpop.permute.xlu0 %1308
        %1311 = vset.pattern.permute.xlu0 2
        %1312 = vperm.xlu0 %1311, %v406
        %v1313 = vpop.permute.xlu0 %1312
        %1315 = vset.pattern.permute.xlu0 2
        %1316 = vperm.xlu0 %1315, %v407
        %v1317 = vpop.permute.xlu0 %1316
        %1319 = vset.pattern.permute.xlu0 2
        %1320 = vperm.xlu0 %1319, %v408
        %v1321 = vpop.permute.xlu0 %1320
        %1323 = vset.pattern.permute.xlu0 2
        %1324 = vperm.xlu0 %1323, %v409
        %v1325 = vpop.permute.xlu0 %1324
        %v1327 = vlaneseq
        %v1328 = vshrl.u32 %v1327, 7
        %v1329 = vsub.s32 2, %v1328
        %v1330 = vrot.slane %v410, %v1329
        %v1331 = vadd.f32 %v1297, %v1330
        %v1332 = vadd.f32 %v1301, %v1330
        %v1333 = vadd.f32 %v1305, %v1330
        %v1334 = vadd.f32 %v1309, %v1330
        %v1335 = vadd.f32 %v1313, %v1330
        %v1336 = vadd.f32 %v1317, %v1330
        %v1337 = vadd.f32 %v1321, %v1330
        %v1338 = vadd.f32 %v1325, %v1330
        %v1339 = vmul.f32 %v1331, 0.2
        %v1340 = vmul.f32 %v1332, 0.2
        %v1341 = vmul.f32 %v1333, 0.2
        %v1342 = vmul.f32 %v1334, 0.2
        %v1343 = vmul.f32 %v1335, 0.2
        %v1344 = vmul.f32 %v1336, 0.2
        %v1345 = vmul.f32 %v1337, 0.2
        %v1346 = vmul.f32 %v1338, 0.2
        %v1347 = vmax.f32 %v1331, %v1339
        %v1348 = vmax.f32 %v1332, %v1340
        %v1349 = vmax.f32 %v1333, %v1341
        %v1350 = vmax.f32 %v1334, %v1342
        %v1351 = vmax.f32 %v1335, %v1343
        %v1352 = vmax.f32 %v1336, %v1344
        %v1353 = vmax.f32 %v1337, %v1345
        %v1354 = vmax.f32 %v1338, %v1346
        %v1355 = vsel %vm561, %v1347, -1e+30
        %v1356 = vsel %vm562, %v1348, -1e+30
        %v1357 = vsel %vm563, %v1349, -1e+30
        %v1358 = vsel %vm564, %v1350, -1e+30
        %v1359 = vsel %vm565, %v1351, -1e+30
        %v1360 = vsel %vm566, %v1352, -1e+30
        %v1361 = vsel %vm567, %v1353, -1e+30
        %v1362 = vsel %vm568, %v1354, -1e+30
        %1363 = vmax.xlane.f32.xlu0 %v1355
        %v1364 = vpop.xlane.xlu0 %1363
        %1365 = vmax.xlane.f32.xlu0 %v1356
        %v1366 = vpop.xlane.xlu0 %1365
        %1367 = vmax.xlane.f32.xlu0 %v1357
        %v1368 = vpop.xlane.xlu0 %1367
        %1369 = vmax.xlane.f32.xlu0 %v1358
        %v1370 = vpop.xlane.xlu0 %1369
        %1371 = vmax.xlane.f32.xlu0 %v1359
        %v1372 = vpop.xlane.xlu0 %1371
        %1373 = vmax.xlane.f32.xlu0 %v1360
        %v1374 = vpop.xlane.xlu0 %1373
        %1375 = vmax.xlane.f32.xlu0 %v1361
        %v1376 = vpop.xlane.xlu0 %1375
        %1377 = vmax.xlane.f32.xlu0 %v1362
        %v1378 = vpop.xlane.xlu0 %1377
        %v1379 = vmax.f32 %v427, %v1364
        %v1380 = vmax.f32 %v428, %v1366
        %v1381 = vmax.f32 %v429, %v1368
        %v1382 = vmax.f32 %v430, %v1370
        %v1383 = vmax.f32 %v431, %v1372
        %v1384 = vmax.f32 %v432, %v1374
        %v1385 = vmax.f32 %v433, %v1376
        %v1386 = vmax.f32 %v434, %v1378
        %v1387 = vsub.f32 %v427, %v1379
        %v1388 = vsub.f32 %v428, %v1380
        %v1389 = vsub.f32 %v429, %v1381
        %v1390 = vsub.f32 %v430, %v1382
        %v1391 = vsub.f32 %v431, %v1383
        %v1392 = vsub.f32 %v432, %v1384
        %v1393 = vsub.f32 %v433, %v1385
        %v1394 = vsub.f32 %v434, %v1386
        %v1395 = vmul.f32 %v1387, 1.442695
        %v1396 = vpow.pop %v1395
        %v1397 = vmul.f32 %v1388, 1.442695
        %v1398 = vpow.pop %v1397
        %v1399 = vmul.f32 %v1389, 1.442695
        %v1400 = vpow.pop %v1399
        %v1401 = vmul.f32 %v1390, 1.442695
        %v1402 = vpow.pop %v1401
        %v1403 = vmul.f32 %v1391, 1.442695
        %v1404 = vpow.pop %v1403
        %v1405 = vmul.f32 %v1392, 1.442695
        %v1406 = vpow.pop %v1405
        %v1407 = vmul.f32 %v1393, 1.442695
        %v1408 = vpow.pop %v1407
        %v1409 = vmul.f32 %v1394, 1.442695
        %v1410 = vpow.pop %v1409
        %1412 = vset.pattern.permute.xlu0 2
        %1413 = vperm.xlu0 %1412, %v1379
        %v1414 = vpop.permute.xlu0 %1413
        %1417 = vset.pattern.permute.xlu0 2
        %1418 = vperm.xlu0 %1417, %v1380
        %v1419 = vpop.permute.xlu0 %1418
        %1422 = vset.pattern.permute.xlu0 2
        %1423 = vperm.xlu0 %1422, %v1381
        %v1424 = vpop.permute.xlu0 %1423
        %1427 = vset.pattern.permute.xlu0 2
        %1428 = vperm.xlu0 %1427, %v1382
        %v1429 = vpop.permute.xlu0 %1428
        %1432 = vset.pattern.permute.xlu0 2
        %1433 = vperm.xlu0 %1432, %v1383
        %v1434 = vpop.permute.xlu0 %1433
        %1437 = vset.pattern.permute.xlu0 2
        %1438 = vperm.xlu0 %1437, %v1384
        %v1439 = vpop.permute.xlu0 %1438
        %1442 = vset.pattern.permute.xlu0 2
        %1443 = vperm.xlu0 %1442, %v1385
        %v1444 = vpop.permute.xlu0 %1443
        %1447 = vset.pattern.permute.xlu0 2
        %1448 = vperm.xlu0 %1447, %v1386
        %v1449 = vpop.permute.xlu0 %1448
        %v1451 = vsub.f32 %v1355, %v1414
        %v1452 = vsub.f32 %v1356, %v1419
        %v1453 = vsub.f32 %v1357, %v1424
        %v1454 = vsub.f32 %v1358, %v1429
        %v1455 = vsub.f32 %v1359, %v1434
        %v1456 = vsub.f32 %v1360, %v1439
        %v1457 = vsub.f32 %v1361, %v1444
        %v1458 = vsub.f32 %v1362, %v1449
        %v1459 = vmul.f32 %v1451, 1.442695
        %v1460 = vpow.pop %v1459
        %v1461 = vmul.f32 %v1452, 1.442695
        %v1462 = vpow.pop %v1461
        %v1463 = vmul.f32 %v1453, 1.442695
        %v1464 = vpow.pop %v1463
        %v1465 = vmul.f32 %v1454, 1.442695
        %v1466 = vpow.pop %v1465
        %v1467 = vmul.f32 %v1455, 1.442695
        %v1468 = vpow.pop %v1467
        %v1469 = vmul.f32 %v1456, 1.442695
        %v1470 = vpow.pop %v1469
        %v1471 = vmul.f32 %v1457, 1.442695
        %v1472 = vpow.pop %v1471
        %v1473 = vmul.f32 %v1458, 1.442695
        %v1474 = vpow.pop %v1473
        %v1475 = vmul.f32 %v1396, %v435
        %v1476 = vmul.f32 %v1398, %v436
        %v1477 = vmul.f32 %v1400, %v437
        %v1478 = vmul.f32 %v1402, %v438
        %v1479 = vmul.f32 %v1404, %v439
        %v1480 = vmul.f32 %v1406, %v440
        %v1481 = vmul.f32 %v1408, %v441
        %v1482 = vmul.f32 %v1410, %v442
        %1483 = vadd.xlane.f32.xlu0 %v1460
        %v1484 = vpop.xlane.xlu0 %1483
        %1485 = vadd.xlane.f32.xlu0 %v1462
        %v1486 = vpop.xlane.xlu0 %1485
        %1487 = vadd.xlane.f32.xlu0 %v1464
        %v1488 = vpop.xlane.xlu0 %1487
        %1489 = vadd.xlane.f32.xlu0 %v1466
        %v1490 = vpop.xlane.xlu0 %1489
        %1491 = vadd.xlane.f32.xlu0 %v1468
        %v1492 = vpop.xlane.xlu0 %1491
        %1493 = vadd.xlane.f32.xlu0 %v1470
        %v1494 = vpop.xlane.xlu0 %1493
        %1495 = vadd.xlane.f32.xlu0 %v1472
        %v1496 = vpop.xlane.xlu0 %1495
        %1497 = vadd.xlane.f32.xlu0 %v1474
        %v1498 = vpop.xlane.xlu0 %1497
        %v1499 = vadd.f32 %v1475, %v1484
        %v1500 = vadd.f32 %v1476, %v1486
        %v1501 = vadd.f32 %v1477, %v1488
        %v1502 = vadd.f32 %v1478, %v1490
        %v1503 = vadd.f32 %v1479, %v1492
        %v1504 = vadd.f32 %v1480, %v1494
        %v1505 = vadd.f32 %v1481, %v1496
        %v1506 = vadd.f32 %v1482, %v1498
        %v1507 = vpack.c.bf16 %v1462, %v1460
        %v1508 = vpack.c.bf16 %v1466, %v1464
        %v1509 = vpack.c.bf16 %v1470, %v1468
        %v1510 = vpack.c.bf16 %v1474, %v1472
        %1511 = vrot.lane.b32.xlu0 %v757, 112
        %v1512 = vpop.permute.xlu0 %1511
        %1513 = vrot.lane.b32.xlu0 %v758, 112
        %v1514 = vpop.permute.xlu0 %1513
        %1515 = vrot.lane.b32.xlu0 %v759, 112
        %v1516 = vpop.permute.xlu0 %1515
        %1517 = vrot.lane.b32.xlu0 %v760, 112
        %v1518 = vpop.permute.xlu0 %1517
        %1519 = vrot.lane.b32.xlu0 %v761, 112
        %v1520 = vpop.permute.xlu0 %1519
        %1521 = vrot.lane.b32.xlu0 %v762, 112
        %v1522 = vpop.permute.xlu0 %1521
        %1523 = vrot.lane.b32.xlu0 %v763, 112
        %v1524 = vpop.permute.xlu0 %1523
        %1525 = vrot.lane.b32.xlu0 %v764, 112
        %v1526 = vpop.permute.xlu0 %1525
        %1535 = vmatprep.subr.bf16.mxu0 0
        %1536 = vmatpush1.bf16.msra.mxu0 %v1512
        %1537 = vmatprep.subr.bf16.mxu0 0
        %1538 = vmatpush1.bf16.msra.mxu0 %v1514
        %1539 = vmatprep.subr.bf16.mxu0 0
        %1540 = vmatpush1.bf16.msra.mxu0 %v1516
        %1541 = vmatprep.subr.bf16.mxu0 0
        %1542 = vmatpush1.bf16.msra.mxu0 %v1518
        %1543 = vmatprep.subr.bf16.mxu0 0
        %1544 = vmatpush1.bf16.msra.mxu0 %v1520
        %1545 = vmatprep.subr.bf16.mxu0 0
        %1546 = vmatpush1.bf16.msra.mxu0 %v1522
        %1547 = vmatprep.subr.bf16.mxu0 0
        %1548 = vmatpush1.bf16.msra.mxu0 %v1524
        %1549 = vmatprep.subr.bf16.mxu0 0
        %1550 = vmatpush1.bf16.msra.mxu0 %v1526
        %1551 = vmatprep.subr.bf16.mxu0 0
        %1552 = vmatpush1.bf16.msra.mxu0 0
        %1553 = vmatprep.subr.bf16.mxu0 0
        %1554 = vmatpush1.bf16.msra.mxu0 0
        %1555 = vmatprep.subr.bf16.mxu0 0
        %1556 = vmatpush1.bf16.msra.mxu0 0
        %1557 = vmatprep.subr.bf16.mxu0 0
        %1558 = vmatpush1.bf16.msra.mxu0 0
        %1559 = vmatprep.subr.bf16.mxu0 0
        %1560 = vmatpush1.bf16.msra.mxu0 0
        %1561 = vmatprep.subr.bf16.mxu0 0
        %1562 = vmatpush1.bf16.msra.mxu0 0
        %1563 = vmatprep.subr.bf16.mxu0 0
        %1564 = vmatpush1.bf16.msra.mxu0 0
        %1565 = vmatprep.subr.bf16.mxu0 0
        %1566 = vmatpush1.bf16.msra.mxu0 0
        %1567 = vmatprep.mubr.bf16.mxu0 0
        %1568 = vmatmul.mubr.bf16.gmra.mrb[0].mxu0 %v1507
        %v1569 = vpop.f32.mrb[0].mxu0
        %v1570 = vadd.f32 0.0, %v1569
        %v1571 = vpop.f32.mrb[0].mxu0
        %v1572 = vpop.f32.mrb[0].mxu0
        %v1573 = vadd.f32 0.0, %v1572
        %v1574 = vpop.f32.mrb[0].mxu0
        %1575 = vmatprep.mubr.bf16.mxu0 0
        %1576 = vmatmul.mubr.bf16.gmra.mrb[0].mxu0 %v1508
        %v1577 = vpop.f32.mrb[0].mxu0
        %v1578 = vadd.f32 0.0, %v1577
        %v1579 = vpop.f32.mrb[0].mxu0
        %v1580 = vpop.f32.mrb[0].mxu0
        %v1581 = vadd.f32 0.0, %v1580
        %v1582 = vpop.f32.mrb[0].mxu0
        %1583 = vmatprep.mubr.bf16.mxu0 0
        %1584 = vmatmul.mubr.bf16.gmra.mrb[0].mxu0 %v1509
        %v1585 = vpop.f32.mrb[0].mxu0
        %v1586 = vadd.f32 0.0, %v1585
        %v1587 = vpop.f32.mrb[0].mxu0
        %v1588 = vpop.f32.mrb[0].mxu0
        %v1589 = vadd.f32 0.0, %v1588
        %v1590 = vpop.f32.mrb[0].mxu0
        %1591 = vmatprep.mubr.bf16.mxu0 0
        %1592 = vmatmul.mubr.bf16.gmra.mrb[0].mxu0 %v1510
        %v1593 = vpop.f32.mrb[0].mxu0
        %v1594 = vadd.f32 0.0, %v1593
        %v1595 = vpop.f32.mrb[0].mxu0
        %v1596 = vpop.f32.mrb[0].mxu0
        %v1597 = vadd.f32 0.0, %v1596
        %v1598 = vpop.f32.mrb[0].mxu0
        %1599 = vdwg.mxu0
        %1601 = vset.pattern.permute.xlu0 2
        %1602 = vperm.xlu0 %1601, %v1396
        %v1603 = vpop.permute.xlu0 %1602
        %1606 = vset.pattern.permute.xlu0 2
        %1607 = vperm.xlu0 %1606, %v1398
        %v1608 = vpop.permute.xlu0 %1607
        %1611 = vset.pattern.permute.xlu0 2
        %1612 = vperm.xlu0 %1611, %v1400
        %v1613 = vpop.permute.xlu0 %1612
        %1616 = vset.pattern.permute.xlu0 2
        %1617 = vperm.xlu0 %1616, %v1402
        %v1618 = vpop.permute.xlu0 %1617
        %1621 = vset.pattern.permute.xlu0 2
        %1622 = vperm.xlu0 %1621, %v1404
        %v1623 = vpop.permute.xlu0 %1622
        %1626 = vset.pattern.permute.xlu0 2
        %1627 = vperm.xlu0 %1626, %v1406
        %v1628 = vpop.permute.xlu0 %1627
        %1631 = vset.pattern.permute.xlu0 2
        %1632 = vperm.xlu0 %1631, %v1408
        %v1633 = vpop.permute.xlu0 %1632
        %1636 = vset.pattern.permute.xlu0 2
        %1637 = vperm.xlu0 %1636, %v1410
        %v1638 = vpop.permute.xlu0 %1637
        %v1640 = vmul.f32 %v1603, %v838
        %v1641 = vmul.f32 %v1608, %v839
        %v1642 = vmul.f32 %v1613, %v840
        %v1643 = vmul.f32 %v1618, %v841
        %v1644 = vmul.f32 %v1623, %v842
        %v1645 = vmul.f32 %v1628, %v843
        %v1646 = vmul.f32 %v1633, %v844
        %v1647 = vmul.f32 %v1638, %v845
        %1656 = vrot.lane.b32.xlu0 %v1570, 16
        %v1657 = vpop.permute.xlu0 %1656
        %1658 = vrot.lane.b32.xlu0 %v1573, 16
        %v1659 = vpop.permute.xlu0 %1658
        %1660 = vrot.lane.b32.xlu0 %v1578, 16
        %v1661 = vpop.permute.xlu0 %1660
        %1662 = vrot.lane.b32.xlu0 %v1581, 16
        %v1663 = vpop.permute.xlu0 %1662
        %1664 = vrot.lane.b32.xlu0 %v1586, 16
        %v1665 = vpop.permute.xlu0 %1664
        %1666 = vrot.lane.b32.xlu0 %v1589, 16
        %v1667 = vpop.permute.xlu0 %1666
        %1668 = vrot.lane.b32.xlu0 %v1594, 16
        %v1669 = vpop.permute.xlu0 %1668
        %1670 = vrot.lane.b32.xlu0 %v1597, 16
        %v1671 = vpop.permute.xlu0 %1670
        %v1680 = vadd.f32 %v1640, %v1657
        %v1681 = vadd.f32 %v1641, %v1659
        %v1682 = vadd.f32 %v1642, %v1661
        %v1683 = vadd.f32 %v1643, %v1663
        %v1684 = vadd.f32 %v1644, %v1665
        %v1685 = vadd.f32 %v1645, %v1667
        %v1686 = vadd.f32 %v1646, %v1669
        %v1687 = vadd.f32 %v1647, %v1671
        %1688 = vset.pattern.permute.xlu0 3
        %1689 = vperm.xlu0 %1688, %v402
        %v1690 = vpop.permute.xlu0 %1689
        %1692 = vset.pattern.permute.xlu0 3
        %1693 = vperm.xlu0 %1692, %v403
        %v1694 = vpop.permute.xlu0 %1693
        %1696 = vset.pattern.permute.xlu0 3
        %1697 = vperm.xlu0 %1696, %v404
        %v1698 = vpop.permute.xlu0 %1697
        %1700 = vset.pattern.permute.xlu0 3
        %1701 = vperm.xlu0 %1700, %v405
        %v1702 = vpop.permute.xlu0 %1701
        %1704 = vset.pattern.permute.xlu0 3
        %1705 = vperm.xlu0 %1704, %v406
        %v1706 = vpop.permute.xlu0 %1705
        %1708 = vset.pattern.permute.xlu0 3
        %1709 = vperm.xlu0 %1708, %v407
        %v1710 = vpop.permute.xlu0 %1709
        %1712 = vset.pattern.permute.xlu0 3
        %1713 = vperm.xlu0 %1712, %v408
        %v1714 = vpop.permute.xlu0 %1713
        %1716 = vset.pattern.permute.xlu0 3
        %1717 = vperm.xlu0 %1716, %v409
        %v1718 = vpop.permute.xlu0 %1717
        %v1720 = vlaneseq
        %v1721 = vshrl.u32 %v1720, 7
        %v1722 = vsub.s32 3, %v1721
        %v1723 = vrot.slane %v410, %v1722
        %v1724 = vadd.f32 %v1690, %v1723
        %v1725 = vadd.f32 %v1694, %v1723
        %v1726 = vadd.f32 %v1698, %v1723
        %v1727 = vadd.f32 %v1702, %v1723
        %v1728 = vadd.f32 %v1706, %v1723
        %v1729 = vadd.f32 %v1710, %v1723
        %v1730 = vadd.f32 %v1714, %v1723
        %v1731 = vadd.f32 %v1718, %v1723
        %v1732 = vmul.f32 %v1724, 0.2
        %v1733 = vmul.f32 %v1725, 0.2
        %v1734 = vmul.f32 %v1726, 0.2
        %v1735 = vmul.f32 %v1727, 0.2
        %v1736 = vmul.f32 %v1728, 0.2
        %v1737 = vmul.f32 %v1729, 0.2
        %v1738 = vmul.f32 %v1730, 0.2
        %v1739 = vmul.f32 %v1731, 0.2
        %v1740 = vmax.f32 %v1724, %v1732
        %v1741 = vmax.f32 %v1725, %v1733
        %v1742 = vmax.f32 %v1726, %v1734
        %v1743 = vmax.f32 %v1727, %v1735
        %v1744 = vmax.f32 %v1728, %v1736
        %v1745 = vmax.f32 %v1729, %v1737
        %v1746 = vmax.f32 %v1730, %v1738
        %v1747 = vmax.f32 %v1731, %v1739
        %v1748 = vsel %vm561, %v1740, -1e+30
        %v1749 = vsel %vm562, %v1741, -1e+30
        %v1750 = vsel %vm563, %v1742, -1e+30
        %v1751 = vsel %vm564, %v1743, -1e+30
        %v1752 = vsel %vm565, %v1744, -1e+30
        %v1753 = vsel %vm566, %v1745, -1e+30
        %v1754 = vsel %vm567, %v1746, -1e+30
        %v1755 = vsel %vm568, %v1747, -1e+30
        %1756 = vmax.xlane.f32.xlu0 %v1748
        %v1757 = vpop.xlane.xlu0 %1756
        %1758 = vmax.xlane.f32.xlu0 %v1749
        %v1759 = vpop.xlane.xlu0 %1758
        %1760 = vmax.xlane.f32.xlu0 %v1750
        %v1761 = vpop.xlane.xlu0 %1760
        %1762 = vmax.xlane.f32.xlu0 %v1751
        %v1763 = vpop.xlane.xlu0 %1762
        %1764 = vmax.xlane.f32.xlu0 %v1752
        %v1765 = vpop.xlane.xlu0 %1764
        %1766 = vmax.xlane.f32.xlu0 %v1753
        %v1767 = vpop.xlane.xlu0 %1766
        %1768 = vmax.xlane.f32.xlu0 %v1754
        %v1769 = vpop.xlane.xlu0 %1768
        %1770 = vmax.xlane.f32.xlu0 %v1755
        %v1771 = vpop.xlane.xlu0 %1770
        %v1772 = vmax.f32 %v427, %v1757
        %v1773 = vmax.f32 %v428, %v1759
        %v1774 = vmax.f32 %v429, %v1761
        %v1775 = vmax.f32 %v430, %v1763
        %v1776 = vmax.f32 %v431, %v1765
        %v1777 = vmax.f32 %v432, %v1767
        %v1778 = vmax.f32 %v433, %v1769
        %v1779 = vmax.f32 %v434, %v1771
        %v1780 = vsub.f32 %v427, %v1772
        %v1781 = vsub.f32 %v428, %v1773
        %v1782 = vsub.f32 %v429, %v1774
        %v1783 = vsub.f32 %v430, %v1775
        %v1784 = vsub.f32 %v431, %v1776
        %v1785 = vsub.f32 %v432, %v1777
        %v1786 = vsub.f32 %v433, %v1778
        %v1787 = vsub.f32 %v434, %v1779
        %v1788 = vmul.f32 %v1780, 1.442695
        %v1789 = vpow.pop %v1788
        %v1790 = vmul.f32 %v1781, 1.442695
        %v1791 = vpow.pop %v1790
        %v1792 = vmul.f32 %v1782, 1.442695
        %v1793 = vpow.pop %v1792
        %v1794 = vmul.f32 %v1783, 1.442695
        %v1795 = vpow.pop %v1794
        %v1796 = vmul.f32 %v1784, 1.442695
        %v1797 = vpow.pop %v1796
        %v1798 = vmul.f32 %v1785, 1.442695
        %v1799 = vpow.pop %v1798
        %v1800 = vmul.f32 %v1786, 1.442695
        %v1801 = vpow.pop %v1800
        %v1802 = vmul.f32 %v1787, 1.442695
        %v1803 = vpow.pop %v1802
        %1805 = vset.pattern.permute.xlu0 3
        %1806 = vperm.xlu0 %1805, %v1772
        %v1807 = vpop.permute.xlu0 %1806
        %1810 = vset.pattern.permute.xlu0 3
        %1811 = vperm.xlu0 %1810, %v1773
        %v1812 = vpop.permute.xlu0 %1811
        %1815 = vset.pattern.permute.xlu0 3
        %1816 = vperm.xlu0 %1815, %v1774
        %v1817 = vpop.permute.xlu0 %1816
        %1820 = vset.pattern.permute.xlu0 3
        %1821 = vperm.xlu0 %1820, %v1775
        %v1822 = vpop.permute.xlu0 %1821
        %1825 = vset.pattern.permute.xlu0 3
        %1826 = vperm.xlu0 %1825, %v1776
        %v1827 = vpop.permute.xlu0 %1826
        %1830 = vset.pattern.permute.xlu0 3
        %1831 = vperm.xlu0 %1830, %v1777
        %v1832 = vpop.permute.xlu0 %1831
        %1835 = vset.pattern.permute.xlu0 3
        %1836 = vperm.xlu0 %1835, %v1778
        %v1837 = vpop.permute.xlu0 %1836
        %1840 = vset.pattern.permute.xlu0 3
        %1841 = vperm.xlu0 %1840, %v1779
        %v1842 = vpop.permute.xlu0 %1841
        %v1844 = vsub.f32 %v1748, %v1807
        %v1845 = vsub.f32 %v1749, %v1812
        %v1846 = vsub.f32 %v1750, %v1817
        %v1847 = vsub.f32 %v1751, %v1822
        %v1848 = vsub.f32 %v1752, %v1827
        %v1849 = vsub.f32 %v1753, %v1832
        %v1850 = vsub.f32 %v1754, %v1837
        %v1851 = vsub.f32 %v1755, %v1842
        %v1852 = vmul.f32 %v1844, 1.442695
        %v1853 = vpow.pop %v1852
        %v1854 = vmul.f32 %v1845, 1.442695
        %v1855 = vpow.pop %v1854
        %v1856 = vmul.f32 %v1846, 1.442695
        %v1857 = vpow.pop %v1856
        %v1858 = vmul.f32 %v1847, 1.442695
        %v1859 = vpow.pop %v1858
        %v1860 = vmul.f32 %v1848, 1.442695
        %v1861 = vpow.pop %v1860
        %v1862 = vmul.f32 %v1849, 1.442695
        %v1863 = vpow.pop %v1862
        %v1864 = vmul.f32 %v1850, 1.442695
        %v1865 = vpow.pop %v1864
        %v1866 = vmul.f32 %v1851, 1.442695
        %v1867 = vpow.pop %v1866
        %v1868 = vmul.f32 %v1789, %v435
        %v1869 = vmul.f32 %v1791, %v436
        %v1870 = vmul.f32 %v1793, %v437
        %v1871 = vmul.f32 %v1795, %v438
        %v1872 = vmul.f32 %v1797, %v439
        %v1873 = vmul.f32 %v1799, %v440
        %v1874 = vmul.f32 %v1801, %v441
        %v1875 = vmul.f32 %v1803, %v442
        %1876 = vadd.xlane.f32.xlu0 %v1853
        %v1877 = vpop.xlane.xlu0 %1876
        %1878 = vadd.xlane.f32.xlu0 %v1855
        %v1879 = vpop.xlane.xlu0 %1878
        %1880 = vadd.xlane.f32.xlu0 %v1857
        %v1881 = vpop.xlane.xlu0 %1880
        %1882 = vadd.xlane.f32.xlu0 %v1859
        %v1883 = vpop.xlane.xlu0 %1882
        %1884 = vadd.xlane.f32.xlu0 %v1861
        %v1885 = vpop.xlane.xlu0 %1884
        %1886 = vadd.xlane.f32.xlu0 %v1863
        %v1887 = vpop.xlane.xlu0 %1886
        %1888 = vadd.xlane.f32.xlu0 %v1865
        %v1889 = vpop.xlane.xlu0 %1888
        %1890 = vadd.xlane.f32.xlu0 %v1867
        %v1891 = vpop.xlane.xlu0 %1890
        %v1892 = vadd.f32 %v1868, %v1877
        %v1893 = vadd.f32 %v1869, %v1879
        %v1894 = vadd.f32 %v1870, %v1881
        %v1895 = vadd.f32 %v1871, %v1883
        %v1896 = vadd.f32 %v1872, %v1885
        %v1897 = vadd.f32 %v1873, %v1887
        %v1898 = vadd.f32 %v1874, %v1889
        %v1899 = vadd.f32 %v1875, %v1891
        %v1900 = vpack.c.bf16 %v1855, %v1853
        %v1901 = vpack.c.bf16 %v1859, %v1857
        %v1902 = vpack.c.bf16 %v1863, %v1861
        %v1903 = vpack.c.bf16 %v1867, %v1865
        %1904 = vrot.lane.b32.xlu0 %v757, 104
        %v1905 = vpop.permute.xlu0 %1904
        %1906 = vrot.lane.b32.xlu0 %v758, 104
        %v1907 = vpop.permute.xlu0 %1906
        %1908 = vrot.lane.b32.xlu0 %v759, 104
        %v1909 = vpop.permute.xlu0 %1908
        %1910 = vrot.lane.b32.xlu0 %v760, 104
        %v1911 = vpop.permute.xlu0 %1910
        %1912 = vrot.lane.b32.xlu0 %v761, 104
        %v1913 = vpop.permute.xlu0 %1912
        %1914 = vrot.lane.b32.xlu0 %v762, 104
        %v1915 = vpop.permute.xlu0 %1914
        %1916 = vrot.lane.b32.xlu0 %v763, 104
        %v1917 = vpop.permute.xlu0 %1916
        %1918 = vrot.lane.b32.xlu0 %v764, 104
        %v1919 = vpop.permute.xlu0 %1918
        %1928 = vmatprep.subr.bf16.mxu0 0
        %1929 = vmatpush1.bf16.msra.mxu0 %v1905
        %1930 = vmatprep.subr.bf16.mxu0 0
        %1931 = vmatpush1.bf16.msra.mxu0 %v1907
        %1932 = vmatprep.subr.bf16.mxu0 0
        %1933 = vmatpush1.bf16.msra.mxu0 %v1909
        %1934 = vmatprep.subr.bf16.mxu0 0
        %1935 = vmatpush1.bf16.msra.mxu0 %v1911
        %1936 = vmatprep.subr.bf16.mxu0 0
        %1937 = vmatpush1.bf16.msra.mxu0 %v1913
        %1938 = vmatprep.subr.bf16.mxu0 0
        %1939 = vmatpush1.bf16.msra.mxu0 %v1915
        %1940 = vmatprep.subr.bf16.mxu0 0
        %1941 = vmatpush1.bf16.msra.mxu0 %v1917
        %1942 = vmatprep.subr.bf16.mxu0 0
        %1943 = vmatpush1.bf16.msra.mxu0 %v1919
        %1944 = vmatprep.subr.bf16.mxu0 0
        %1945 = vmatpush1.bf16.msra.mxu0 0
        %1946 = vmatprep.subr.bf16.mxu0 0
        %1947 = vmatpush1.bf16.msra.mxu0 0
        %1948 = vmatprep.subr.bf16.mxu0 0
        %1949 = vmatpush1.bf16.msra.mxu0 0
        %1950 = vmatprep.subr.bf16.mxu0 0
        %1951 = vmatpush1.bf16.msra.mxu0 0
        %1952 = vmatprep.subr.bf16.mxu0 0
        %1953 = vmatpush1.bf16.msra.mxu0 0
        %1954 = vmatprep.subr.bf16.mxu0 0
        %1955 = vmatpush1.bf16.msra.mxu0 0
        %1956 = vmatprep.subr.bf16.mxu0 0
        %1957 = vmatpush1.bf16.msra.mxu0 0
        %1958 = vmatprep.subr.bf16.mxu0 0
        %1959 = vmatpush1.bf16.msra.mxu0 0
        %1960 = vmatprep.mubr.bf16.mxu0 0
        %1961 = vmatmul.mubr.bf16.gmra.mrb[0].mxu0 %v1900
        %v1962 = vpop.f32.mrb[0].mxu0
        %v1963 = vadd.f32 0.0, %v1962
        %v1964 = vpop.f32.mrb[0].mxu0
        %v1965 = vpop.f32.mrb[0].mxu0
        %v1966 = vadd.f32 0.0, %v1965
        %v1967 = vpop.f32.mrb[0].mxu0
        %1968 = vmatprep.mubr.bf16.mxu0 0
        %1969 = vmatmul.mubr.bf16.gmra.mrb[0].mxu0 %v1901
        %v1970 = vpop.f32.mrb[0].mxu0
        %v1971 = vadd.f32 0.0, %v1970
        %v1972 = vpop.f32.mrb[0].mxu0
        %v1973 = vpop.f32.mrb[0].mxu0
        %v1974 = vadd.f32 0.0, %v1973
        %v1975 = vpop.f32.mrb[0].mxu0
        %1976 = vmatprep.mubr.bf16.mxu0 0
        %1977 = vmatmul.mubr.bf16.gmra.mrb[0].mxu0 %v1902
        %v1978 = vpop.f32.mrb[0].mxu0
        %v1979 = vadd.f32 0.0, %v1978
        %v1980 = vpop.f32.mrb[0].mxu0
        %v1981 = vpop.f32.mrb[0].mxu0
        %v1982 = vadd.f32 0.0, %v1981
        %v1983 = vpop.f32.mrb[0].mxu0
        %1984 = vmatprep.mubr.bf16.mxu0 0
        %1985 = vmatmul.mubr.bf16.gmra.mrb[0].mxu0 %v1903
        %v1986 = vpop.f32.mrb[0].mxu0
        %v1987 = vadd.f32 0.0, %v1986
        %v1988 = vpop.f32.mrb[0].mxu0
        %v1989 = vpop.f32.mrb[0].mxu0
        %v1990 = vadd.f32 0.0, %v1989
        %v1991 = vpop.f32.mrb[0].mxu0
        %1992 = vdwg.mxu0
        %1994 = vset.pattern.permute.xlu0 3
        %1995 = vperm.xlu0 %1994, %v1789
        %v1996 = vpop.permute.xlu0 %1995
        %1999 = vset.pattern.permute.xlu0 3
        %2000 = vperm.xlu0 %1999, %v1791
        %v2001 = vpop.permute.xlu0 %2000
        %2004 = vset.pattern.permute.xlu0 3
        %2005 = vperm.xlu0 %2004, %v1793
        %v2006 = vpop.permute.xlu0 %2005
        %2009 = vset.pattern.permute.xlu0 3
        %2010 = vperm.xlu0 %2009, %v1795
        %v2011 = vpop.permute.xlu0 %2010
        %2014 = vset.pattern.permute.xlu0 3
        %2015 = vperm.xlu0 %2014, %v1797
        %v2016 = vpop.permute.xlu0 %2015
        %2019 = vset.pattern.permute.xlu0 3
        %2020 = vperm.xlu0 %2019, %v1799
        %v2021 = vpop.permute.xlu0 %2020
        %2024 = vset.pattern.permute.xlu0 3
        %2025 = vperm.xlu0 %2024, %v1801
        %v2026 = vpop.permute.xlu0 %2025
        %2029 = vset.pattern.permute.xlu0 3
        %2030 = vperm.xlu0 %2029, %v1803
        %v2031 = vpop.permute.xlu0 %2030
        %v2033 = vmul.f32 %v1996, %v838
        %v2034 = vmul.f32 %v2001, %v839
        %v2035 = vmul.f32 %v2006, %v840
        %v2036 = vmul.f32 %v2011, %v841
        %v2037 = vmul.f32 %v2016, %v842
        %v2038 = vmul.f32 %v2021, %v843
        %v2039 = vmul.f32 %v2026, %v844
        %v2040 = vmul.f32 %v2031, %v845
        %2049 = vrot.lane.b32.xlu0 %v1963, 24
        %v2050 = vpop.permute.xlu0 %2049
        %2051 = vrot.lane.b32.xlu0 %v1966, 24
        %v2052 = vpop.permute.xlu0 %2051
        %2053 = vrot.lane.b32.xlu0 %v1971, 24
        %v2054 = vpop.permute.xlu0 %2053
        %2055 = vrot.lane.b32.xlu0 %v1974, 24
        %v2056 = vpop.permute.xlu0 %2055
        %2057 = vrot.lane.b32.xlu0 %v1979, 24
        %v2058 = vpop.permute.xlu0 %2057
        %2059 = vrot.lane.b32.xlu0 %v1982, 24
        %v2060 = vpop.permute.xlu0 %2059
        %2061 = vrot.lane.b32.xlu0 %v1987, 24
        %v2062 = vpop.permute.xlu0 %2061
        %2063 = vrot.lane.b32.xlu0 %v1990, 24
        %v2064 = vpop.permute.xlu0 %2063
        %v2073 = vadd.f32 %v2033, %v2050
        %v2074 = vadd.f32 %v2034, %v2052
        %v2075 = vadd.f32 %v2035, %v2054
        %v2076 = vadd.f32 %v2036, %v2056
        %v2077 = vadd.f32 %v2037, %v2058
        %v2078 = vadd.f32 %v2038, %v2060
        %v2079 = vadd.f32 %v2039, %v2062
        %v2080 = vadd.f32 %v2040, %v2064
        %vm2081 = vcmask 7168
        %v2082 = vsel %vm2081, %v593, %v986
        %v2083 = vsel %vm2081, %v594, %v987
        %v2084 = vsel %vm2081, %v595, %v988
        %v2085 = vsel %vm2081, %v596, %v989
        %v2086 = vsel %vm2081, %v597, %v990
        %v2087 = vsel %vm2081, %v598, %v991
        %v2088 = vsel %vm2081, %v599, %v992
        %v2089 = vsel %vm2081, %v600, %v993
        %vm2090 = vcmask 15360
        %v2091 = vsel %vm2090, %v2082, %v1379
        %v2092 = vsel %vm2090, %v2083, %v1380
        %v2093 = vsel %vm2090, %v2084, %v1381
        %v2094 = vsel %vm2090, %v2085, %v1382
        %v2095 = vsel %vm2090, %v2086, %v1383
        %v2096 = vsel %vm2090, %v2087, %v1384
        %v2097 = vsel %vm2090, %v2088, %v1385
        %v2098 = vsel %vm2090, %v2089, %v1386
        %vm2099 = vcmask 23552
        %v2100 = vsel %vm2099, %v2091, %v1772
        %v2101 = vsel %vm2099, %v2092, %v1773
        %v2102 = vsel %vm2099, %v2093, %v1774
        %v2103 = vsel %vm2099, %v2094, %v1775
        %v2104 = vsel %vm2099, %v2095, %v1776
        %v2105 = vsel %vm2099, %v2096, %v1777
        %v2106 = vsel %vm2099, %v2097, %v1778
        %v2107 = vsel %vm2099, %v2098, %v1779
        %vm2108 = vcmask 31744
        %2109 = vst.msk [vmem:[#allocation2] sm:$0xff] %vm2108, %v2100
        %2110 = vst.msk [vmem:[#allocation2 + $0x8] sm:$0xff] %vm2108, %v2101
        %2111 = vst.msk [vmem:[#allocation2 + $0x10] sm:$0xff] %vm2108, %v2102
        %2112 = vst.msk [vmem:[#allocation2 + $0x18] sm:$0xff] %vm2108, %v2103
        %2113 = vst.msk [vmem:[#allocation2 + $0x20] sm:$0xff] %vm2108, %v2104
        %2114 = vst.msk [vmem:[#allocation2 + $0x28] sm:$0xff] %vm2108, %v2105
        %2115 = vst.msk [vmem:[#allocation2 + $0x30] sm:$0xff] %vm2108, %v2106
        %2116 = vst.msk [vmem:[#allocation2 + $0x38] sm:$0xff] %vm2108, %v2107
        %v2117 = vsel %vm2081, %v713, %v1106
        %v2118 = vsel %vm2081, %v714, %v1107
        %v2119 = vsel %vm2081, %v715, %v1108
        %v2120 = vsel %vm2081, %v716, %v1109
        %v2121 = vsel %vm2081, %v717, %v1110
        %v2122 = vsel %vm2081, %v718, %v1111
        %v2123 = vsel %vm2081, %v719, %v1112
        %v2124 = vsel %vm2081, %v720, %v1113
        %v2125 = vsel %vm2090, %v2117, %v1499
        %v2126 = vsel %vm2090, %v2118, %v1500
        %v2127 = vsel %vm2090, %v2119, %v1501
        %v2128 = vsel %vm2090, %v2120, %v1502
        %v2129 = vsel %vm2090, %v2121, %v1503
        %v2130 = vsel %vm2090, %v2122, %v1504
        %v2131 = vsel %vm2090, %v2123, %v1505
        %v2132 = vsel %vm2090, %v2124, %v1506
        %v2133 = vsel %vm2099, %v2125, %v1892
        %v2134 = vsel %vm2099, %v2126, %v1893
        %v2135 = vsel %vm2099, %v2127, %v1894
        %v2136 = vsel %vm2099, %v2128, %v1895
        %v2137 = vsel %vm2099, %v2129, %v1896
        %v2138 = vsel %vm2099, %v2130, %v1897
        %v2139 = vsel %vm2099, %v2131, %v1898
        %v2140 = vsel %vm2099, %v2132, %v1899
        %2141 = vst.msk [vmem:[#allocation3] sm:$0xff] %vm2108, %v2133
        %2142 = vst.msk [vmem:[#allocation3 + $0x8] sm:$0xff] %vm2108, %v2134
        %2143 = vst.msk [vmem:[#allocation3 + $0x10] sm:$0xff] %vm2108, %v2135
        %2144 = vst.msk [vmem:[#allocation3 + $0x18] sm:$0xff] %vm2108, %v2136
        %2145 = vst.msk [vmem:[#allocation3 + $0x20] sm:$0xff] %vm2108, %v2137
        %2146 = vst.msk [vmem:[#allocation3 + $0x28] sm:$0xff] %vm2108, %v2138
        %2147 = vst.msk [vmem:[#allocation3 + $0x30] sm:$0xff] %vm2108, %v2139
        %2148 = vst.msk [vmem:[#allocation3 + $0x38] sm:$0xff] %vm2108, %v2140
        %vm2149 = vcmask 64512
        %v2150 = vsel %vm2149, %v894, %v1287
        %v2151 = vsel %vm2149, %v895, %v1288
        %v2152 = vsel %vm2149, %v896, %v1289
        %v2153 = vsel %vm2149, %v897, %v1290
        %v2154 = vsel %vm2149, %v898, %v1291
        %v2155 = vsel %vm2149, %v899, %v1292
        %v2156 = vsel %vm2149, %v900, %v1293
        %v2157 = vsel %vm2149, %v901, %v1294
        %vm2158 = vcmask 130048
        %v2159 = vsel %vm2158, %v2150, %v1680
        %v2160 = vsel %vm2158, %v2151, %v1681
        %v2161 = vsel %vm2158, %v2152, %v1682
        %v2162 = vsel %vm2158, %v2153, %v1683
        %v2163 = vsel %vm2158, %v2154, %v1684
        %v2164 = vsel %vm2158, %v2155, %v1685
        %v2165 = vsel %vm2158, %v2156, %v1686
        %v2166 = vsel %vm2158, %v2157, %v1687
        %vm2167 = vcmask 195584
        %v2168 = vsel %vm2167, %v2159, %v2073
        %v2169 = vsel %vm2167, %v2160, %v2074
        %v2170 = vsel %vm2167, %v2161, %v2075
        %v2171 = vsel %vm2167, %v2162, %v2076
        %v2172 = vsel %vm2167, %v2163, %v2077
        %v2173 = vsel %vm2167, %v2164, %v2078
        %v2174 = vsel %vm2167, %v2165, %v2079
        %v2175 = vsel %vm2167, %v2166, %v2080
        %vm2176 = vcmask 261120
        %2177 = vst.msk [vmem:[#allocation4] sm:$0xff] %vm2176, %v2168
        %2178 = vst.msk [vmem:[#allocation4 + $0x8] sm:$0xff] %vm2176, %v2169
        %2179 = vst.msk [vmem:[#allocation4 + $0x10] sm:$0xff] %vm2176, %v2170
        %2180 = vst.msk [vmem:[#allocation4 + $0x18] sm:$0xff] %vm2176, %v2171
        %2181 = vst.msk [vmem:[#allocation4 + $0x20] sm:$0xff] %vm2176, %v2172
        %2182 = vst.msk [vmem:[#allocation4 + $0x28] sm:$0xff] %vm2176, %v2173
        %2183 = vst.msk [vmem:[#allocation4 + $0x30] sm:$0xff] %vm2176, %v2174
        %2184 = vst.msk [vmem:[#allocation4 + $0x38] sm:$0xff] %vm2176, %v2175
        %p2185 = scmp.eq.s32.totalorder %s21, 1
        // Predicated region
        $region83: #{tpu_custom_call.1} parent=73 // pred_check
          %p2186 = pneg %p2185
        $region84: #{tpu_custom_call.1} parent=73 // pred_check_branch
          %2188 = sbr.rel (%p2186) target = $region86
        $region85: #{tpu_custom_call.1} parent=73 // pred_region
          %v2189 = vld [vmem:[#allocation3] sm:$0xff]
          %v2190 = vld [vmem:[#allocation3 + $0x8] sm:$0xff]
          %v2191 = vld [vmem:[#allocation3 + $0x10] sm:$0xff]
          %v2192 = vld [vmem:[#allocation3 + $0x18] sm:$0xff]
          %v2193 = vld [vmem:[#allocation3 + $0x20] sm:$0xff]
          %v2194 = vld [vmem:[#allocation3 + $0x28] sm:$0xff]
          %v2195 = vld [vmem:[#allocation3 + $0x30] sm:$0xff]
          %v2196 = vld [vmem:[#allocation3 + $0x38] sm:$0xff]
          %v2197 = vrcp.pop %v2189
          %v2198 = vrcp.pop %v2190
          %v2199 = vrcp.pop %v2191
          %v2200 = vrcp.pop %v2192
          %v2201 = vrcp.pop %v2193
          %v2202 = vrcp.pop %v2194
          %v2203 = vrcp.pop %v2195
          %v2204 = vrcp.pop %v2196
          %v2205 = vld [vmem:[#allocation4] sm:$0xff]
          %v2206 = vld [vmem:[#allocation4 + $0x8] sm:$0xff]
          %v2207 = vld [vmem:[#allocation4 + $0x10] sm:$0xff]
          %v2208 = vld [vmem:[#allocation4 + $0x18] sm:$0xff]
          %v2209 = vld [vmem:[#allocation4 + $0x20] sm:$0xff]
          %v2210 = vld [vmem:[#allocation4 + $0x28] sm:$0xff]
          %v2211 = vld [vmem:[#allocation4 + $0x30] sm:$0xff]
          %v2212 = vld [vmem:[#allocation4 + $0x38] sm:$0xff]
          %2214 = vset.pattern.permute.xlu0 0
          %2215 = vperm.xlu0 %2214, %v2197
          %v2216 = vpop.permute.xlu0 %2215
          %2219 = vset.pattern.permute.xlu0 0
          %2220 = vperm.xlu0 %2219, %v2198
          %v2221 = vpop.permute.xlu0 %2220
          %2224 = vset.pattern.permute.xlu0 0
          %2225 = vperm.xlu0 %2224, %v2199
          %v2226 = vpop.permute.xlu0 %2225
          %2229 = vset.pattern.permute.xlu0 0
          %2230 = vperm.xlu0 %2229, %v2200
          %v2231 = vpop.permute.xlu0 %2230
          %2234 = vset.pattern.permute.xlu0 0
          %2235 = vperm.xlu0 %2234, %v2201
          %v2236 = vpop.permute.xlu0 %2235
          %2239 = vset.pattern.permute.xlu0 0
          %2240 = vperm.xlu0 %2239, %v2202
          %v2241 = vpop.permute.xlu0 %2240
          %2244 = vset.pattern.permute.xlu0 0
          %2245 = vperm.xlu0 %2244, %v2203
          %v2246 = vpop.permute.xlu0 %2245
          %2249 = vset.pattern.permute.xlu0 0
          %2250 = vperm.xlu0 %2249, %v2204
          %v2251 = vpop.permute.xlu0 %2250
          %v2253 = vmul.f32 %v2205, %v2216
          %v2254 = vmul.f32 %v2206, %v2221
          %v2255 = vmul.f32 %v2207, %v2226
          %v2256 = vmul.f32 %v2208, %v2231
          %v2257 = vmul.f32 %v2209, %v2236
          %v2258 = vmul.f32 %v2210, %v2241
          %v2259 = vmul.f32 %v2211, %v2246
          %v2260 = vmul.f32 %v2212, %v2251
          %2261 = vset.pattern.permute.xlu0 1
          %2262 = vperm.xlu0 %2261, %v2197
          %v2263 = vpop.permute.xlu0 %2262
          %2265 = vset.pattern.permute.xlu0 1
          %2266 = vperm.xlu0 %2265, %v2198
          %v2267 = vpop.permute.xlu0 %2266
          %2269 = vset.pattern.permute.xlu0 1
          %2270 = vperm.xlu0 %2269, %v2199
          %v2271 = vpop.permute.xlu0 %2270
          %2273 = vset.pattern.permute.xlu0 1
          %2274 = vperm.xlu0 %2273, %v2200
          %v2275 = vpop.permute.xlu0 %2274
          %2277 = vset.pattern.permute.xlu0 1
          %2278 = vperm.xlu0 %2277, %v2201
          %v2279 = vpop.permute.xlu0 %2278
          %2281 = vset.pattern.permute.xlu0 1
          %2282 = vperm.xlu0 %2281, %v2202
          %v2283 = vpop.permute.xlu0 %2282
          %2285 = vset.pattern.permute.xlu0 1
          %2286 = vperm.xlu0 %2285, %v2203
          %v2287 = vpop.permute.xlu0 %2286
          %2289 = vset.pattern.permute.xlu0 1
          %2290 = vperm.xlu0 %2289, %v2204
          %v2291 = vpop.permute.xlu0 %2290
          %v2293 = vmul.f32 %v2205, %v2263
          %v2294 = vmul.f32 %v2206, %v2267
          %v2295 = vmul.f32 %v2207, %v2271
          %v2296 = vmul.f32 %v2208, %v2275
          %v2297 = vmul.f32 %v2209, %v2279
          %v2298 = vmul.f32 %v2210, %v2283
          %v2299 = vmul.f32 %v2211, %v2287
          %v2300 = vmul.f32 %v2212, %v2291
          %2301 = vset.pattern.permute.xlu0 2
          %2302 = vperm.xlu0 %2301, %v2197
          %v2303 = vpop.permute.xlu0 %2302
          %2305 = vset.pattern.permute.xlu0 2
          %2306 = vperm.xlu0 %2305, %v2198
          %v2307 = vpop.permute.xlu0 %2306
          %2309 = vset.pattern.permute.xlu0 2
          %2310 = vperm.xlu0 %2309, %v2199
          %v2311 = vpop.permute.xlu0 %2310
          %2313 = vset.pattern.permute.xlu0 2
          %2314 = vperm.xlu0 %2313, %v2200
          %v2315 = vpop.permute.xlu0 %2314
          %2317 = vset.pattern.permute.xlu0 2
          %2318 = vperm.xlu0 %2317, %v2201
          %v2319 = vpop.permute.xlu0 %2318
          %2321 = vset.pattern.permute.xlu0 2
          %2322 = vperm.xlu0 %2321, %v2202
          %v2323 = vpop.permute.xlu0 %2322
          %2325 = vset.pattern.permute.xlu0 2
          %2326 = vperm.xlu0 %2325, %v2203
          %v2327 = vpop.permute.xlu0 %2326
          %2329 = vset.pattern.permute.xlu0 2
          %2330 = vperm.xlu0 %2329, %v2204
          %v2331 = vpop.permute.xlu0 %2330
          %v2333 = vmul.f32 %v2205, %v2303
          %v2334 = vmul.f32 %v2206, %v2307
          %v2335 = vmul.f32 %v2207, %v2311
          %v2336 = vmul.f32 %v2208, %v2315
          %v2337 = vmul.f32 %v2209, %v2319
          %v2338 = vmul.f32 %v2210, %v2323
          %v2339 = vmul.f32 %v2211, %v2327
          %v2340 = vmul.f32 %v2212, %v2331
          %2341 = vset.pattern.permute.xlu0 3
          %2342 = vperm.xlu0 %2341, %v2197
          %v2343 = vpop.permute.xlu0 %2342
          %2345 = vset.pattern.permute.xlu0 3
          %2346 = vperm.xlu0 %2345, %v2198
          %v2347 = vpop.permute.xlu0 %2346
          %2349 = vset.pattern.permute.xlu0 3
          %2350 = vperm.xlu0 %2349, %v2199
          %v2351 = vpop.permute.xlu0 %2350
          %2353 = vset.pattern.permute.xlu0 3
          %2354 = vperm.xlu0 %2353, %v2200
          %v2355 = vpop.permute.xlu0 %2354
          %2357 = vset.pattern.permute.xlu0 3
          %2358 = vperm.xlu0 %2357, %v2201
          %v2359 = vpop.permute.xlu0 %2358
          %2361 = vset.pattern.permute.xlu0 3
          %2362 = vperm.xlu0 %2361, %v2202
          %v2363 = vpop.permute.xlu0 %2362
          %2365 = vset.pattern.permute.xlu0 3
          %2366 = vperm.xlu0 %2365, %v2203
          %v2367 = vpop.permute.xlu0 %2366
          %2369 = vset.pattern.permute.xlu0 3
          %2370 = vperm.xlu0 %2369, %v2204
          %v2371 = vpop.permute.xlu0 %2370
          %v2373 = vmul.f32 %v2205, %v2343
          %v2374 = vmul.f32 %v2206, %v2347
          %v2375 = vmul.f32 %v2207, %v2351
          %v2376 = vmul.f32 %v2208, %v2355
          %v2377 = vmul.f32 %v2209, %v2359
          %v2378 = vmul.f32 %v2210, %v2363
          %v2379 = vmul.f32 %v2211, %v2367
          %v2380 = vmul.f32 %v2212, %v2371
          %v2381 = vsel %vm2149, %v2253, %v2293
          %v2382 = vsel %vm2149, %v2254, %v2294
          %v2383 = vsel %vm2149, %v2255, %v2295
          %v2384 = vsel %vm2149, %v2256, %v2296
          %v2385 = vsel %vm2149, %v2257, %v2297
          %v2386 = vsel %vm2149, %v2258, %v2298
          %v2387 = vsel %vm2149, %v2259, %v2299
          %v2388 = vsel %vm2149, %v2260, %v2300
          %v2389 = vsel %vm2158, %v2381, %v2333
          %v2390 = vsel %vm2158, %v2382, %v2334
          %v2391 = vsel %vm2158, %v2383, %v2335
          %v2392 = vsel %vm2158, %v2384, %v2336
          %v2393 = vsel %vm2158, %v2385, %v2337
          %v2394 = vsel %vm2158, %v2386, %v2338
          %v2395 = vsel %vm2158, %v2387, %v2339
          %v2396 = vsel %vm2158, %v2388, %v2340
          %v2397 = vsel %vm2167, %v2389, %v2373
          %v2398 = vsel %vm2167, %v2390, %v2374
          %v2399 = vsel %vm2167, %v2391, %v2375
          %v2400 = vsel %vm2167, %v2392, %v2376
          %v2401 = vsel %vm2167, %v2393, %v2377
          %v2402 = vsel %vm2167, %v2394, %v2378
          %v2403 = vsel %vm2167, %v2395, %v2379
          %v2404 = vsel %vm2167, %v2396, %v2380
          %v2405 = vld [vmem:[%s346] sm:$0xff]
          %v2406 = vld [vmem:[%s346 + $0x8] sm:$0xff]
          %v2407 = vld [vmem:[%s346 + $0x10] sm:$0xff]
          %v2408 = vld [vmem:[%s346 + $0x18] sm:$0xff]
          %v2409 = vld [vmem:[%s346 + $0x20] sm:$0xff]
          %v2410 = vld [vmem:[%s346 + $0x28] sm:$0xff]
          %v2411 = vld [vmem:[%s346 + $0x30] sm:$0xff]
          %v2412 = vld [vmem:[%s346 + $0x38] sm:$0xff]
          %v2413 = vadd.f32 %v2397, %v2405
          %v2414 = vadd.f32 %v2398, %v2406
          %v2415 = vadd.f32 %v2399, %v2407
          %v2416 = vadd.f32 %v2400, %v2408
          %v2417 = vadd.f32 %v2401, %v2409
          %v2418 = vadd.f32 %v2402, %v2410
          %v2419 = vadd.f32 %v2403, %v2411
          %v2420 = vadd.f32 %v2404, %v2412
          %2421 = vst.msk [vmem:[%s363] sm:$0xff] %vm2176, %v2413
          %2422 = vst.msk [vmem:[%s363 + $0x8] sm:$0xff] %vm2176, %v2414
          %2423 = vst.msk [vmem:[%s363 + $0x10] sm:$0xff] %vm2176, %v2415
          %2424 = vst.msk [vmem:[%s363 + $0x18] sm:$0xff] %vm2176, %v2416
          %2425 = vst.msk [vmem:[%s363 + $0x20] sm:$0xff] %vm2176, %v2417
          %2426 = vst.msk [vmem:[%s363 + $0x28] sm:$0xff] %vm2176, %v2418
          %2427 = vst.msk [vmem:[%s363 + $0x30] sm:$0xff] %vm2176, %v2419
          %2428 = vst.msk [vmem:[%s363 + $0x38] sm:$0xff] %vm2176, %v2420
        $region86: #{tpu_custom_call.1} parent=73 // pred_fallthru
          _
        %s2429 = smul.u32 8, %s20
        %p2430 = scmp.lt.s32.totalorder %s2429, 31
        %s2431 = scalar_select %p2430, %s2429, 31
        %s2432 = smul.addr %s2431, 8
        %s2433 = scalar_lea.vmem %s5, %s2432
        // Predicated region
        $region87: #{tpu_custom_call.1} parent=73 // pred_check
          %p2434 = pneg %p178
        $region88: #{tpu_custom_call.1} parent=73 // pred_check_branch
          %2436 = sbr.rel (%p2434) target = $region90
        $region89: #{tpu_custom_call.1} parent=73 // pred_region
          %s2437 = smul.u32 8, %s20
        $region90: #{tpu_custom_call.1} parent=73 // pred_fallthru
          _
      $region74: #{tpu_custom_call.1} parent=5 // pred_fallthru
        _
      %p2438 = scmp.le.s32.totalorder 2, %s11
      // Predicated region
      $region91: #{tpu_custom_call.1} parent=5 // pred_check
        %p2439 = pneg %p2438
      $region92: #{tpu_custom_call.1} parent=5 // pred_check_branch
        %2441 = sbr.rel (%p2439) target = $region94
      $region93: #{tpu_custom_call.1} parent=5 // pred_region
        %s2442 = ssub.s32 %s11, 2
        // Predicated region
        $region95: #{tpu_custom_call.1} parent=93 // pred_check
          %p2443 = pneg %p184
        $region96: #{tpu_custom_call.1} parent=93 // pred_check_branch
          %2445 = sbr.rel (%p2443) target = $region98
        $region97: #{tpu_custom_call.1} parent=93 // pred_region
          %s2446 = smul.u32 8, %s22
          %p2447 = scmp.lt.s32.totalorder %s2446, 31
          %s2448 = scalar_select %p2447, %s2446, 31
          %s2449 = smul.addr %s2448, 8
          %s2450 = scalar_lea.vmem %s5, %s2449
        $region98: #{tpu_custom_call.1} parent=93 // pred_fallthru
          _
      $region94: #{tpu_custom_call.1} parent=5 // pred_fallthru
        _
    $region6: #{tpu_custom_call.1} parent=1 // loop_footer
      %s15 = sadd.s32 1, %s11
    $region7: #{tpu_custom_call.1} parent=1 // loop_footer_branch
      %10 = sbr.rel target = $region3
    $region8: #{tpu_custom_call.1} parent=1 // loop_exit
      _

</llo_original>
